<compile_context>
chip_gen: v7x
topology: tpu7x:2x2x1
jax: 0.10.0
libtpu: 0.0.40
codegen_flags: <defaults>
</compile_context>

<pallas_src>
import functools

import jax
import jax.numpy as jnp
import numpy as np
from jax import lax
from jax.experimental import pallas as pl
from jax.experimental.pallas import tpu as pltpu


# ---------------------------------------------------------------------------
# Fused Pallas kernel: the whole 11-conv stack on a (Cin, lanes) activation slab
# ---------------------------------------------------------------------------
def network11_kernel(x_ref, mask_ref, wint_ref, wmid_ref, wout_ref, o_ref):
    K = mask_ref.shape[0]          # number of taps
    pad = K // 2                   # 'same' padding (odd K)
    N = x_ref.shape[-1]            # lanes in this block (= batches_per_block * L)

    # Hoist the per-tap boundary masks and the bias ones-row out of all loops.
    masks = [mask_ref[t] for t in range(K)]          # each (1, N) f32, 0/1
    ones_row = jnp.ones((1, N), jnp.float32)

    def conv_fused(x, w2d, relu):
        # x: (Cin, N) f32;  w2d: (Cout, K*Cin + 1)  (bias folded as last column)
        cols = []
        for t in range(K):                           # static unroll over taps
            s = t - pad                              # signal offset of tap t
            if s == 0:
                cols.append(x)
            else:
                # roll so that col[l] = x[l + s]; mask kills positions that
                # would read across a batch-segment boundary (== zero padding)
                cols.append(pltpu.roll(x, (-s) % N, axis=1) * masks[t])
        cols.append(ones_row)                        # bias row
        blk = jnp.concatenate(cols, axis=0)          # (K*Cin + 1, N) im2col block
        y = jnp.dot(w2d, blk, preferred_element_type=jnp.float32)
        return jnp.maximum(y, 0.0) if relu else y

    h = x_ref[...].astype(jnp.float32)               # (downsample, N)
    h = conv_fused(h, wint_ref[...], relu=True)      # convint + ReLU
    for i in range(wmid_ref.shape[0]):               # conv1..conv9 + ReLU (unrolled)
        h = conv_fused(h, wmid_ref[i], relu=True)
    o_ref[...] = conv_fused(h, wout_ref[...], relu=False).astype(o_ref.dtype)


# ---------------------------------------------------------------------------
# Wrapper: pack weights, fold batch into lanes, launch the kernel
# ---------------------------------------------------------------------------
def network11_pallas(x, params, downsample):
    wint, bint, wmid, bmid, wout, bout = params
    B, _, W = x.shape
    d = downsample
    assert W % d == 0
    L = W // d
    K, C, _ = wint.shape
    n_mid = wmid.shape[0]

    # --- host-side weight packing: (Cout, K*Cin + 1), bias folded as last col.
    #     Column order is tap-major / cin-minor, matching the im2col block.
    def pack2d(w, b):                                 # w: (K, Cout, Cin), b: (Cout, 1)
        k, co, ci = w.shape
        return jnp.concatenate(
            [jnp.transpose(w, (1, 0, 2)).reshape(co, k * ci), b],
            axis=1).astype(jnp.float32)

    wint2 = pack2d(wint, bint)                                             # (C, K*d+1)
    wmid2 = jnp.concatenate(
        [jnp.transpose(wmid, (0, 2, 1, 3)).reshape(n_mid, C, K * C), bmid],
        axis=2).astype(jnp.float32)                                        # (n_mid, C, K*C+1)
    wout2 = pack2d(wout, bout)                                             # (d, K*C+1)

    # --- pixel-unshuffle + fold batch into the lane axis: (d, B*L)
    #     xd[c, b*L + l] = x[b, 0, l*d + c]
    xd = jnp.transpose(x.reshape(B, L, d), (2, 0, 1)).reshape(d, B * L)

    # --- grid: one fat step (v5e/v6e, single TensorCore) or two parallel
    #     lane-chunks on v7x (2 TensorCores per chip).
    nblk = 1
    try:
        if ("7" in jax.devices()[0].device_kind
                and B % 2 == 0 and ((B // 2) * L) % 128 == 0):
            nblk = 2
    except Exception:
        pass
    lanes = (B // nblk) * L

    # --- static per-tap boundary masks (host constants, shared by all steps):
    #     position l (local within each length-L segment) is valid for tap t
    #     iff 0 <= l + (t - pad) < L  (reproduces zero 'same' padding and keeps
    #     batch segments independent after the lane-axis roll).
    pad = K // 2
    pos = np.arange(lanes) % L
    mask = np.stack(
        [((pos + (t - pad) >= 0) & (pos + (t - pad) < L)) for t in range(K)]
    ).astype(np.float32)[:, None, :]                                       # (K, 1, lanes)
    mask = jnp.asarray(mask)

    out = pl.pallas_call(
        network11_kernel,
        out_shape=jax.ShapeDtypeStruct((d, B * L), x.dtype),
        grid_spec=pltpu.PrefetchScalarGridSpec(
            num_scalar_prefetch=0,
            grid=(nblk,),
            in_specs=[
                pl.BlockSpec((d, lanes), lambda i: (0, i)),
                pl.BlockSpec(mask.shape, lambda i: (0, 0, 0)),
                pl.BlockSpec(wint2.shape, lambda i: (0, 0)),
                pl.BlockSpec(wmid2.shape, lambda i: (0, 0, 0)),
                pl.BlockSpec(wout2.shape, lambda i: (0, 0)),
            ],
            out_specs=pl.BlockSpec((d, lanes), lambda i: (0, i)),
        ),
        compiler_params=pltpu.CompilerParams(
            dimension_semantics=("parallel",)),
    )(xd, mask, wint2, wmid2, wout2)

    # --- pixel-shuffle back: (d, B*L) -> (B, 1, W);  y[b,0,l*d+c] = out[c, b*L+l]
    return jnp.transpose(out.reshape(d, B, L), (1, 2, 0)).reshape(B, 1, W)


# ---------------------------------------------------------------------------
# Pure-JAX reference (for correctness check)
# ---------------------------------------------------------------------------
def pixel_unshuffle_1d(x, d):
    B, C, W = x.shape
    x = x.reshape(B, C, W // d, d)
    x = jnp.transpose(x, (0, 3, 1, 2))
    return x.reshape(B, C * d, W // d)


def pixel_shuffle_1d(x, d):
    B, C, W = x.shape
    x = x.reshape(B, d, C // d, W)
    x = jnp.transpose(x, (0, 2, 3, 1))
    return x.reshape(B, C // d, W * d)


def conv1d_ref(x, w, b, relu):
    # x: (B, Cin, L); w: (K, Cout, Cin); b: (Cout, 1)
    wt = jnp.transpose(w, (1, 2, 0))  # (Cout, Cin, K)
    pad = w.shape[0] // 2
    y = lax.conv_general_dilated(
        x, wt, window_strides=(1,), padding=[(pad, pad)],
        dimension_numbers=('NCH', 'OIH', 'NCH'))
    y = y + b[None, :, :]
    if relu:
        y = jnp.maximum(y, 0.0)
    return y


def network11_ref(x, params, downsample):
    wint, bint, wmid, bmid, wout, bout = params
    h = pixel_unshuffle_1d(x, downsample)
    h = conv1d_ref(h, wint, bint, True)
    for i in range(wmid.shape[0]):
        h = conv1d_ref(h, wmid[i], bmid[i], True)
    h = conv1d_ref(h, wout, bout, False)
    return pixel_shuffle_1d(h, downsample)


# ---------------------------------------------------------------------------
# Deterministic parameter construction + run
# ---------------------------------------------------------------------------
def make_params(key, downsample, kerneln, channeln, n_mid=9):
    keys = jax.random.split(key, 6)

    def init_w(k, shape, fan_in):
        return (jax.random.normal(k, shape, jnp.float32) / jnp.sqrt(fan_in))

    wint = init_w(keys[0], (kerneln, channeln, downsample), downsample * kerneln)
    bint = 0.01 * jax.random.normal(keys[1], (channeln, 1), jnp.float32)
    wmid = init_w(keys[2], (n_mid, kerneln, channeln, channeln), channeln * kerneln)
    bmid = 0.01 * jax.random.normal(keys[3], (n_mid, channeln, 1), jnp.float32)
    wout = init_w(keys[4], (kerneln, downsample, channeln), channeln * kerneln)
    bout = 0.01 * jax.random.normal(keys[5], (downsample, 1), jnp.float32)
    return (wint, bint, wmid, bmid, wout, bout)


if __name__ == "__main__":
    downsample = 4
    signal_len = 512       # -> internal L = 128 (lane-aligned)
    kerneln = 5            # odd kernel, padding = kerneln // 2 keeps length
    channeln = 32
    batch = 2

    key = jax.random.PRNGKey(0)
    kx, kp = jax.random.split(key)
    x = jax.random.normal(kx, (batch, 1, signal_len), jnp.float32)
    params = make_params(kp, downsample, kerneln, channeln)

    fwd = jax.jit(functools.partial(network11_pallas, downsample=downsample))
    out = fwd(x, params)
    out = jax.block_until_ready(out)

    ref = network11_ref(x, params, downsample)
    assert out.shape == (batch, 1, signal_len), out.shape
    assert jnp.allclose(out, ref, rtol=5e-4, atol=5e-4), \
        float(jnp.max(jnp.abs(out - ref)))

    print("KERNEL_OK")
</pallas_src>

<mosaic_0001>
module attributes {stable_mosaic.version = 11 : i64} {
  func.func @network11_kernel(%arg0: i32, %arg1: memref<4x256xf32, #tpu.memory_space<vmem>>, %arg2: memref<5x1x256xf32, #tpu.memory_space<vmem>>, %arg3: memref<32x21xf32, #tpu.memory_space<vmem>>, %arg4: memref<9x32x161xf32, #tpu.memory_space<vmem>>, %arg5: memref<4x161xf32, #tpu.memory_space<vmem>>, %arg6: memref<4x256xf32, #tpu.memory_space<vmem>>) attributes {dimension_semantics = [#tpu.dimension_semantics<parallel>], iteration_bounds = array<i64: 1>, scalar_prefetch = 0 : i64, scratch_operands = 0 : i64, tpu.core_type = #tpu.core_type<tc>, window_params = [{transform_indices = @transform_0, window_bounds = array<i64: 4, 256>}, {pipeline_mode = #tpu.pipeline_mode<synchronous>, transform_indices = @transform_1, window_bounds = array<i64: 5, 1, 256>}, {pipeline_mode = #tpu.pipeline_mode<synchronous>, transform_indices = @transform_2, window_bounds = array<i64: 32, 21>}, {pipeline_mode = #tpu.pipeline_mode<synchronous>, transform_indices = @transform_3, window_bounds = array<i64: 9, 32, 161>}, {pipeline_mode = #tpu.pipeline_mode<synchronous>, transform_indices = @transform_4, window_bounds = array<i64: 4, 161>}, {transform_indices = @transform_5, window_bounds = array<i64: 4, 256>}]} {
    %c0 = arith.constant 0 : index
    %c0_0 = arith.constant 0 : index
    %c0_1 = arith.constant 0 : index
    %0 = vector.load %arg2[%c0, %c0_0, %c0_1] : memref<5x1x256xf32, #tpu.memory_space<vmem>>, vector<1x1x256xf32>
    %1 = vector.shape_cast %0 : vector<1x1x256xf32> to vector<1x256xf32>
    %c1 = arith.constant 1 : index
    %c0_2 = arith.constant 0 : index
    %c0_3 = arith.constant 0 : index
    %2 = vector.load %arg2[%c1, %c0_2, %c0_3] : memref<5x1x256xf32, #tpu.memory_space<vmem>>, vector<1x1x256xf32>
    %3 = vector.shape_cast %2 : vector<1x1x256xf32> to vector<1x256xf32>
    %c3 = arith.constant 3 : index
    %c0_4 = arith.constant 0 : index
    %c0_5 = arith.constant 0 : index
    %4 = vector.load %arg2[%c3, %c0_4, %c0_5] : memref<5x1x256xf32, #tpu.memory_space<vmem>>, vector<1x1x256xf32>
    %5 = vector.shape_cast %4 : vector<1x1x256xf32> to vector<1x256xf32>
    %c4 = arith.constant 4 : index
    %c0_6 = arith.constant 0 : index
    %c0_7 = arith.constant 0 : index
    %6 = vector.load %arg2[%c4, %c0_6, %c0_7] : memref<5x1x256xf32, #tpu.memory_space<vmem>>, vector<1x1x256xf32>
    %7 = vector.shape_cast %6 : vector<1x1x256xf32> to vector<1x256xf32>
    %cst = arith.constant 1.000000e+00 : f32
    %8 = vector.broadcast %cst : f32 to vector<1x256xf32>
    %c0_8 = arith.constant 0 : index
    %c0_9 = arith.constant 0 : index
    %9 = vector.load %arg1[%c0_8, %c0_9] : memref<4x256xf32, #tpu.memory_space<vmem>>, vector<4x256xf32>
    %c0_10 = arith.constant 0 : index
    %c0_11 = arith.constant 0 : index
    %10 = vector.load %arg3[%c0_10, %c0_11] : memref<32x21xf32, #tpu.memory_space<vmem>>, vector<32x21xf32>
    %c2_i32 = arith.constant 2 : i32
    %11 = tpu.dynamic_rotate %9 by %c2_i32 dim 1 : vector<4x256xf32>, i32 -> vector<4x256xf32>
    %12 = vector.broadcast %1 : vector<1x256xf32> to vector<4x256xf32>
    %13 = arith.mulf %11, %12 : vector<4x256xf32>
    %c1_i32 = arith.constant 1 : i32
    %14 = tpu.dynamic_rotate %9 by %c1_i32 dim 1 : vector<4x256xf32>, i32 -> vector<4x256xf32>
    %15 = vector.broadcast %3 : vector<1x256xf32> to vector<4x256xf32>
    %16 = arith.mulf %14, %15 : vector<4x256xf32>
    %c255_i32 = arith.constant 255 : i32
    %17 = tpu.dynamic_rotate %9 by %c255_i32 dim 1 : vector<4x256xf32>, i32 -> vector<4x256xf32>
    %18 = vector.broadcast %5 : vector<1x256xf32> to vector<4x256xf32>
    %19 = arith.mulf %17, %18 : vector<4x256xf32>
    %c254_i32 = arith.constant 254 : i32
    %20 = tpu.dynamic_rotate %9 by %c254_i32 dim 1 : vector<4x256xf32>, i32 -> vector<4x256xf32>
    %21 = vector.broadcast %7 : vector<1x256xf32> to vector<4x256xf32>
    %22 = arith.mulf %20, %21 : vector<4x256xf32>
    %23 = tpu.concatenate %13, %16, %9, %19, %22, %8 in 0 : vector<4x256xf32>, vector<4x256xf32>, vector<4x256xf32>, vector<4x256xf32>, vector<4x256xf32>, vector<1x256xf32> -> vector<21x256xf32>
    %cst_12 = arith.constant dense<0.000000e+00> : vector<32x256xf32>
    %24 = tpu.matmul %10, %23, %cst_12 {dimension_numbers = #tpu.dot_dimension_numbers<[1], [0], [0], [1], [0, 0, 1, 1], [], []>} : vector<32x21xf32>, vector<21x256xf32>, vector<32x256xf32> -> vector<32x256xf32>
    %cst_13 = arith.constant 0.000000e+00 : f32
    %25 = vector.broadcast %cst_13 : f32 to vector<32x256xf32>
    %26 = arith.maximumf %24, %25 : vector<32x256xf32>
    %c0_14 = arith.constant 0 : index
    %c0_15 = arith.constant 0 : index
    %c0_16 = arith.constant 0 : index
    %27 = vector.load %arg4[%c0_14, %c0_15, %c0_16] : memref<9x32x161xf32, #tpu.memory_space<vmem>>, vector<1x32x161xf32>
    %28 = vector.shape_cast %27 : vector<1x32x161xf32> to vector<32x161xf32>
    %c2_i32_17 = arith.constant 2 : i32
    %29 = tpu.dynamic_rotate %26 by %c2_i32_17 dim 1 : vector<32x256xf32>, i32 -> vector<32x256xf32>
    %30 = vector.broadcast %1 : vector<1x256xf32> to vector<32x256xf32>
    %31 = arith.mulf %29, %30 : vector<32x256xf32>
    %c1_i32_18 = arith.constant 1 : i32
    %32 = tpu.dynamic_rotate %26 by %c1_i32_18 dim 1 : vector<32x256xf32>, i32 -> vector<32x256xf32>
    %33 = vector.broadcast %3 : vector<1x256xf32> to vector<32x256xf32>
    %34 = arith.mulf %32, %33 : vector<32x256xf32>
    %c255_i32_19 = arith.constant 255 : i32
    %35 = tpu.dynamic_rotate %26 by %c255_i32_19 dim 1 : vector<32x256xf32>, i32 -> vector<32x256xf32>
    %36 = vector.broadcast %5 : vector<1x256xf32> to vector<32x256xf32>
    %37 = arith.mulf %35, %36 : vector<32x256xf32>
    %c254_i32_20 = arith.constant 254 : i32
    %38 = tpu.dynamic_rotate %26 by %c254_i32_20 dim 1 : vector<32x256xf32>, i32 -> vector<32x256xf32>
    %39 = vector.broadcast %7 : vector<1x256xf32> to vector<32x256xf32>
    %40 = arith.mulf %38, %39 : vector<32x256xf32>
    %41 = tpu.concatenate %31, %34, %26, %37, %40, %8 in 0 : vector<32x256xf32>, vector<32x256xf32>, vector<32x256xf32>, vector<32x256xf32>, vector<32x256xf32>, vector<1x256xf32> -> vector<161x256xf32>
    %cst_21 = arith.constant dense<0.000000e+00> : vector<32x256xf32>
    %42 = tpu.matmul %28, %41, %cst_21 {dimension_numbers = #tpu.dot_dimension_numbers<[1], [0], [0], [1], [0, 0, 1, 1], [], []>} : vector<32x161xf32>, vector<161x256xf32>, vector<32x256xf32> -> vector<32x256xf32>
    %cst_22 = arith.constant 0.000000e+00 : f32
    %43 = vector.broadcast %cst_22 : f32 to vector<32x256xf32>
    %44 = arith.maximumf %42, %43 : vector<32x256xf32>
    %c1_23 = arith.constant 1 : index
    %c0_24 = arith.constant 0 : index
    %c0_25 = arith.constant 0 : index
    %45 = vector.load %arg4[%c1_23, %c0_24, %c0_25] : memref<9x32x161xf32, #tpu.memory_space<vmem>>, vector<1x32x161xf32>
    %46 = vector.shape_cast %45 : vector<1x32x161xf32> to vector<32x161xf32>
    %c2_i32_26 = arith.constant 2 : i32
    %47 = tpu.dynamic_rotate %44 by %c2_i32_26 dim 1 : vector<32x256xf32>, i32 -> vector<32x256xf32>
    %48 = vector.broadcast %1 : vector<1x256xf32> to vector<32x256xf32>
    %49 = arith.mulf %47, %48 : vector<32x256xf32>
    %c1_i32_27 = arith.constant 1 : i32
    %50 = tpu.dynamic_rotate %44 by %c1_i32_27 dim 1 : vector<32x256xf32>, i32 -> vector<32x256xf32>
    %51 = vector.broadcast %3 : vector<1x256xf32> to vector<32x256xf32>
    %52 = arith.mulf %50, %51 : vector<32x256xf32>
    %c255_i32_28 = arith.constant 255 : i32
    %53 = tpu.dynamic_rotate %44 by %c255_i32_28 dim 1 : vector<32x256xf32>, i32 -> vector<32x256xf32>
    %54 = vector.broadcast %5 : vector<1x256xf32> to vector<32x256xf32>
    %55 = arith.mulf %53, %54 : vector<32x256xf32>
    %c254_i32_29 = arith.constant 254 : i32
    %56 = tpu.dynamic_rotate %44 by %c254_i32_29 dim 1 : vector<32x256xf32>, i32 -> vector<32x256xf32>
    %57 = vector.broadcast %7 : vector<1x256xf32> to vector<32x256xf32>
    %58 = arith.mulf %56, %57 : vector<32x256xf32>
    %59 = tpu.concatenate %49, %52, %44, %55, %58, %8 in 0 : vector<32x256xf32>, vector<32x256xf32>, vector<32x256xf32>, vector<32x256xf32>, vector<32x256xf32>, vector<1x256xf32> -> vector<161x256xf32>
    %cst_30 = arith.constant dense<0.000000e+00> : vector<32x256xf32>
    %60 = tpu.matmul %46, %59, %cst_30 {dimension_numbers = #tpu.dot_dimension_numbers<[1], [0], [0], [1], [0, 0, 1, 1], [], []>} : vector<32x161xf32>, vector<161x256xf32>, vector<32x256xf32> -> vector<32x256xf32>
    %cst_31 = arith.constant 0.000000e+00 : f32
    %61 = vector.broadcast %cst_31 : f32 to vector<32x256xf32>
    %62 = arith.maximumf %60, %61 : vector<32x256xf32>
    %c2 = arith.constant 2 : index
    %c0_32 = arith.constant 0 : index
    %c0_33 = arith.constant 0 : index
    %63 = vector.load %arg4[%c2, %c0_32, %c0_33] : memref<9x32x161xf32, #tpu.memory_space<vmem>>, vector<1x32x161xf32>
    %64 = vector.shape_cast %63 : vector<1x32x161xf32> to vector<32x161xf32>
    %c2_i32_34 = arith.constant 2 : i32
    %65 = tpu.dynamic_rotate %62 by %c2_i32_34 dim 1 : vector<32x256xf32>, i32 -> vector<32x256xf32>
    %66 = vector.broadcast %1 : vector<1x256xf32> to vector<32x256xf32>
    %67 = arith.mulf %65, %66 : vector<32x256xf32>
    %c1_i32_35 = arith.constant 1 : i32
    %68 = tpu.dynamic_rotate %62 by %c1_i32_35 dim 1 : vector<32x256xf32>, i32 -> vector<32x256xf32>
    %69 = vector.broadcast %3 : vector<1x256xf32> to vector<32x256xf32>
    %70 = arith.mulf %68, %69 : vector<32x256xf32>
    %c255_i32_36 = arith.constant 255 : i32
    %71 = tpu.dynamic_rotate %62 by %c255_i32_36 dim 1 : vector<32x256xf32>, i32 -> vector<32x256xf32>
    %72 = vector.broadcast %5 : vector<1x256xf32> to vector<32x256xf32>
    %73 = arith.mulf %71, %72 : vector<32x256xf32>
    %c254_i32_37 = arith.constant 254 : i32
    %74 = tpu.dynamic_rotate %62 by %c254_i32_37 dim 1 : vector<32x256xf32>, i32 -> vector<32x256xf32>
    %75 = vector.broadcast %7 : vector<1x256xf32> to vector<32x256xf32>
    %76 = arith.mulf %74, %75 : vector<32x256xf32>
    %77 = tpu.concatenate %67, %70, %62, %73, %76, %8 in 0 : vector<32x256xf32>, vector<32x256xf32>, vector<32x256xf32>, vector<32x256xf32>, vector<32x256xf32>, vector<1x256xf32> -> vector<161x256xf32>
    %cst_38 = arith.constant dense<0.000000e+00> : vector<32x256xf32>
    %78 = tpu.matmul %64, %77, %cst_38 {dimension_numbers = #tpu.dot_dimension_numbers<[1], [0], [0], [1], [0, 0, 1, 1], [], []>} : vector<32x161xf32>, vector<161x256xf32>, vector<32x256xf32> -> vector<32x256xf32>
    %cst_39 = arith.constant 0.000000e+00 : f32
    %79 = vector.broadcast %cst_39 : f32 to vector<32x256xf32>
    %80 = arith.maximumf %78, %79 : vector<32x256xf32>
    %c3_40 = arith.constant 3 : index
    %c0_41 = arith.constant 0 : index
    %c0_42 = arith.constant 0 : index
    %81 = vector.load %arg4[%c3_40, %c0_41, %c0_42] : memref<9x32x161xf32, #tpu.memory_space<vmem>>, vector<1x32x161xf32>
    %82 = vector.shape_cast %81 : vector<1x32x161xf32> to vector<32x161xf32>
    %c2_i32_43 = arith.constant 2 : i32
    %83 = tpu.dynamic_rotate %80 by %c2_i32_43 dim 1 : vector<32x256xf32>, i32 -> vector<32x256xf32>
    %84 = vector.broadcast %1 : vector<1x256xf32> to vector<32x256xf32>
    %85 = arith.mulf %83, %84 : vector<32x256xf32>
    %c1_i32_44 = arith.constant 1 : i32
    %86 = tpu.dynamic_rotate %80 by %c1_i32_44 dim 1 : vector<32x256xf32>, i32 -> vector<32x256xf32>
    %87 = vector.broadcast %3 : vector<1x256xf32> to vector<32x256xf32>
    %88 = arith.mulf %86, %87 : vector<32x256xf32>
    %c255_i32_45 = arith.constant 255 : i32
    %89 = tpu.dynamic_rotate %80 by %c255_i32_45 dim 1 : vector<32x256xf32>, i32 -> vector<32x256xf32>
    %90 = vector.broadcast %5 : vector<1x256xf32> to vector<32x256xf32>
    %91 = arith.mulf %89, %90 : vector<32x256xf32>
    %c254_i32_46 = arith.constant 254 : i32
    %92 = tpu.dynamic_rotate %80 by %c254_i32_46 dim 1 : vector<32x256xf32>, i32 -> vector<32x256xf32>
    %93 = vector.broadcast %7 : vector<1x256xf32> to vector<32x256xf32>
    %94 = arith.mulf %92, %93 : vector<32x256xf32>
    %95 = tpu.concatenate %85, %88, %80, %91, %94, %8 in 0 : vector<32x256xf32>, vector<32x256xf32>, vector<32x256xf32>, vector<32x256xf32>, vector<32x256xf32>, vector<1x256xf32> -> vector<161x256xf32>
    %cst_47 = arith.constant dense<0.000000e+00> : vector<32x256xf32>
    %96 = tpu.matmul %82, %95, %cst_47 {dimension_numbers = #tpu.dot_dimension_numbers<[1], [0], [0], [1], [0, 0, 1, 1], [], []>} : vector<32x161xf32>, vector<161x256xf32>, vector<32x256xf32> -> vector<32x256xf32>
    %cst_48 = arith.constant 0.000000e+00 : f32
    %97 = vector.broadcast %cst_48 : f32 to vector<32x256xf32>
    %98 = arith.maximumf %96, %97 : vector<32x256xf32>
    %c4_49 = arith.constant 4 : index
    %c0_50 = arith.constant 0 : index
    %c0_51 = arith.constant 0 : index
    %99 = vector.load %arg4[%c4_49, %c0_50, %c0_51] : memref<9x32x161xf32, #tpu.memory_space<vmem>>, vector<1x32x161xf32>
    %100 = vector.shape_cast %99 : vector<1x32x161xf32> to vector<32x161xf32>
    %c2_i32_52 = arith.constant 2 : i32
    %101 = tpu.dynamic_rotate %98 by %c2_i32_52 dim 1 : vector<32x256xf32>, i32 -> vector<32x256xf32>
    %102 = vector.broadcast %1 : vector<1x256xf32> to vector<32x256xf32>
    %103 = arith.mulf %101, %102 : vector<32x256xf32>
    %c1_i32_53 = arith.constant 1 : i32
    %104 = tpu.dynamic_rotate %98 by %c1_i32_53 dim 1 : vector<32x256xf32>, i32 -> vector<32x256xf32>
    %105 = vector.broadcast %3 : vector<1x256xf32> to vector<32x256xf32>
    %106 = arith.mulf %104, %105 : vector<32x256xf32>
    %c255_i32_54 = arith.constant 255 : i32
    %107 = tpu.dynamic_rotate %98 by %c255_i32_54 dim 1 : vector<32x256xf32>, i32 -> vector<32x256xf32>
    %108 = vector.broadcast %5 : vector<1x256xf32> to vector<32x256xf32>
    %109 = arith.mulf %107, %108 : vector<32x256xf32>
    %c254_i32_55 = arith.constant 254 : i32
    %110 = tpu.dynamic_rotate %98 by %c254_i32_55 dim 1 : vector<32x256xf32>, i32 -> vector<32x256xf32>
    %111 = vector.broadcast %7 : vector<1x256xf32> to vector<32x256xf32>
    %112 = arith.mulf %110, %111 : vector<32x256xf32>
    %113 = tpu.concatenate %103, %106, %98, %109, %112, %8 in 0 : vector<32x256xf32>, vector<32x256xf32>, vector<32x256xf32>, vector<32x256xf32>, vector<32x256xf32>, vector<1x256xf32> -> vector<161x256xf32>
    %cst_56 = arith.constant dense<0.000000e+00> : vector<32x256xf32>
    %114 = tpu.matmul %100, %113, %cst_56 {dimension_numbers = #tpu.dot_dimension_numbers<[1], [0], [0], [1], [0, 0, 1, 1], [], []>} : vector<32x161xf32>, vector<161x256xf32>, vector<32x256xf32> -> vector<32x256xf32>
    %cst_57 = arith.constant 0.000000e+00 : f32
    %115 = vector.broadcast %cst_57 : f32 to vector<32x256xf32>
    %116 = arith.maximumf %114, %115 : vector<32x256xf32>
    %c5 = arith.constant 5 : index
    %c0_58 = arith.constant 0 : index
    %c0_59 = arith.constant 0 : index
    %117 = vector.load %arg4[%c5, %c0_58, %c0_59] : memref<9x32x161xf32, #tpu.memory_space<vmem>>, vector<1x32x161xf32>
    %118 = vector.shape_cast %117 : vector<1x32x161xf32> to vector<32x161xf32>
    %c2_i32_60 = arith.constant 2 : i32
    %119 = tpu.dynamic_rotate %116 by %c2_i32_60 dim 1 : vector<32x256xf32>, i32 -> vector<32x256xf32>
    %120 = vector.broadcast %1 : vector<1x256xf32> to vector<32x256xf32>
    %121 = arith.mulf %119, %120 : vector<32x256xf32>
    %c1_i32_61 = arith.constant 1 : i32
    %122 = tpu.dynamic_rotate %116 by %c1_i32_61 dim 1 : vector<32x256xf32>, i32 -> vector<32x256xf32>
    %123 = vector.broadcast %3 : vector<1x256xf32> to vector<32x256xf32>
    %124 = arith.mulf %122, %123 : vector<32x256xf32>
    %c255_i32_62 = arith.constant 255 : i32
    %125 = tpu.dynamic_rotate %116 by %c255_i32_62 dim 1 : vector<32x256xf32>, i32 -> vector<32x256xf32>
    %126 = vector.broadcast %5 : vector<1x256xf32> to vector<32x256xf32>
    %127 = arith.mulf %125, %126 : vector<32x256xf32>
    %c254_i32_63 = arith.constant 254 : i32
    %128 = tpu.dynamic_rotate %116 by %c254_i32_63 dim 1 : vector<32x256xf32>, i32 -> vector<32x256xf32>
    %129 = vector.broadcast %7 : vector<1x256xf32> to vector<32x256xf32>
    %130 = arith.mulf %128, %129 : vector<32x256xf32>
    %131 = tpu.concatenate %121, %124, %116, %127, %130, %8 in 0 : vector<32x256xf32>, vector<32x256xf32>, vector<32x256xf32>, vector<32x256xf32>, vector<32x256xf32>, vector<1x256xf32> -> vector<161x256xf32>
    %cst_64 = arith.constant dense<0.000000e+00> : vector<32x256xf32>
    %132 = tpu.matmul %118, %131, %cst_64 {dimension_numbers = #tpu.dot_dimension_numbers<[1], [0], [0], [1], [0, 0, 1, 1], [], []>} : vector<32x161xf32>, vector<161x256xf32>, vector<32x256xf32> -> vector<32x256xf32>
    %cst_65 = arith.constant 0.000000e+00 : f32
    %133 = vector.broadcast %cst_65 : f32 to vector<32x256xf32>
    %134 = arith.maximumf %132, %133 : vector<32x256xf32>
    %c6 = arith.constant 6 : index
    %c0_66 = arith.constant 0 : index
    %c0_67 = arith.constant 0 : index
    %135 = vector.load %arg4[%c6, %c0_66, %c0_67] : memref<9x32x161xf32, #tpu.memory_space<vmem>>, vector<1x32x161xf32>
    %136 = vector.shape_cast %135 : vector<1x32x161xf32> to vector<32x161xf32>
    %c2_i32_68 = arith.constant 2 : i32
    %137 = tpu.dynamic_rotate %134 by %c2_i32_68 dim 1 : vector<32x256xf32>, i32 -> vector<32x256xf32>
    %138 = vector.broadcast %1 : vector<1x256xf32> to vector<32x256xf32>
    %139 = arith.mulf %137, %138 : vector<32x256xf32>
    %c1_i32_69 = arith.constant 1 : i32
    %140 = tpu.dynamic_rotate %134 by %c1_i32_69 dim 1 : vector<32x256xf32>, i32 -> vector<32x256xf32>
    %141 = vector.broadcast %3 : vector<1x256xf32> to vector<32x256xf32>
    %142 = arith.mulf %140, %141 : vector<32x256xf32>
    %c255_i32_70 = arith.constant 255 : i32
    %143 = tpu.dynamic_rotate %134 by %c255_i32_70 dim 1 : vector<32x256xf32>, i32 -> vector<32x256xf32>
    %144 = vector.broadcast %5 : vector<1x256xf32> to vector<32x256xf32>
    %145 = arith.mulf %143, %144 : vector<32x256xf32>
    %c254_i32_71 = arith.constant 254 : i32
    %146 = tpu.dynamic_rotate %134 by %c254_i32_71 dim 1 : vector<32x256xf32>, i32 -> vector<32x256xf32>
    %147 = vector.broadcast %7 : vector<1x256xf32> to vector<32x256xf32>
    %148 = arith.mulf %146, %147 : vector<32x256xf32>
    %149 = tpu.concatenate %139, %142, %134, %145, %148, %8 in 0 : vector<32x256xf32>, vector<32x256xf32>, vector<32x256xf32>, vector<32x256xf32>, vector<32x256xf32>, vector<1x256xf32> -> vector<161x256xf32>
    %cst_72 = arith.constant dense<0.000000e+00> : vector<32x256xf32>
    %150 = tpu.matmul %136, %149, %cst_72 {dimension_numbers = #tpu.dot_dimension_numbers<[1], [0], [0], [1], [0, 0, 1, 1], [], []>} : vector<32x161xf32>, vector<161x256xf32>, vector<32x256xf32> -> vector<32x256xf32>
    %cst_73 = arith.constant 0.000000e+00 : f32
    %151 = vector.broadcast %cst_73 : f32 to vector<32x256xf32>
    %152 = arith.maximumf %150, %151 : vector<32x256xf32>
    %c7 = arith.constant 7 : index
    %c0_74 = arith.constant 0 : index
    %c0_75 = arith.constant 0 : index
    %153 = vector.load %arg4[%c7, %c0_74, %c0_75] : memref<9x32x161xf32, #tpu.memory_space<vmem>>, vector<1x32x161xf32>
    %154 = vector.shape_cast %153 : vector<1x32x161xf32> to vector<32x161xf32>
    %c2_i32_76 = arith.constant 2 : i32
    %155 = tpu.dynamic_rotate %152 by %c2_i32_76 dim 1 : vector<32x256xf32>, i32 -> vector<32x256xf32>
    %156 = vector.broadcast %1 : vector<1x256xf32> to vector<32x256xf32>
    %157 = arith.mulf %155, %156 : vector<32x256xf32>
    %c1_i32_77 = arith.constant 1 : i32
    %158 = tpu.dynamic_rotate %152 by %c1_i32_77 dim 1 : vector<32x256xf32>, i32 -> vector<32x256xf32>
    %159 = vector.broadcast %3 : vector<1x256xf32> to vector<32x256xf32>
    %160 = arith.mulf %158, %159 : vector<32x256xf32>
    %c255_i32_78 = arith.constant 255 : i32
    %161 = tpu.dynamic_rotate %152 by %c255_i32_78 dim 1 : vector<32x256xf32>, i32 -> vector<32x256xf32>
    %162 = vector.broadcast %5 : vector<1x256xf32> to vector<32x256xf32>
    %163 = arith.mulf %161, %162 : vector<32x256xf32>
    %c254_i32_79 = arith.constant 254 : i32
    %164 = tpu.dynamic_rotate %152 by %c254_i32_79 dim 1 : vector<32x256xf32>, i32 -> vector<32x256xf32>
    %165 = vector.broadcast %7 : vector<1x256xf32> to vector<32x256xf32>
    %166 = arith.mulf %164, %165 : vector<32x256xf32>
    %167 = tpu.concatenate %157, %160, %152, %163, %166, %8 in 0 : vector<32x256xf32>, vector<32x256xf32>, vector<32x256xf32>, vector<32x256xf32>, vector<32x256xf32>, vector<1x256xf32> -> vector<161x256xf32>
    %cst_80 = arith.constant dense<0.000000e+00> : vector<32x256xf32>
    %168 = tpu.matmul %154, %167, %cst_80 {dimension_numbers = #tpu.dot_dimension_numbers<[1], [0], [0], [1], [0, 0, 1, 1], [], []>} : vector<32x161xf32>, vector<161x256xf32>, vector<32x256xf32> -> vector<32x256xf32>
    %cst_81 = arith.constant 0.000000e+00 : f32
    %169 = vector.broadcast %cst_81 : f32 to vector<32x256xf32>
    %170 = arith.maximumf %168, %169 : vector<32x256xf32>
    %c8 = arith.constant 8 : index
    %c0_82 = arith.constant 0 : index
    %c0_83 = arith.constant 0 : index
    %171 = vector.load %arg4[%c8, %c0_82, %c0_83] : memref<9x32x161xf32, #tpu.memory_space<vmem>>, vector<1x32x161xf32>
    %172 = vector.shape_cast %171 : vector<1x32x161xf32> to vector<32x161xf32>
    %c2_i32_84 = arith.constant 2 : i32
    %173 = tpu.dynamic_rotate %170 by %c2_i32_84 dim 1 : vector<32x256xf32>, i32 -> vector<32x256xf32>
    %174 = vector.broadcast %1 : vector<1x256xf32> to vector<32x256xf32>
    %175 = arith.mulf %173, %174 : vector<32x256xf32>
    %c1_i32_85 = arith.constant 1 : i32
    %176 = tpu.dynamic_rotate %170 by %c1_i32_85 dim 1 : vector<32x256xf32>, i32 -> vector<32x256xf32>
    %177 = vector.broadcast %3 : vector<1x256xf32> to vector<32x256xf32>
    %178 = arith.mulf %176, %177 : vector<32x256xf32>
    %c255_i32_86 = arith.constant 255 : i32
    %179 = tpu.dynamic_rotate %170 by %c255_i32_86 dim 1 : vector<32x256xf32>, i32 -> vector<32x256xf32>
    %180 = vector.broadcast %5 : vector<1x256xf32> to vector<32x256xf32>
    %181 = arith.mulf %179, %180 : vector<32x256xf32>
    %c254_i32_87 = arith.constant 254 : i32
    %182 = tpu.dynamic_rotate %170 by %c254_i32_87 dim 1 : vector<32x256xf32>, i32 -> vector<32x256xf32>
    %183 = vector.broadcast %7 : vector<1x256xf32> to vector<32x256xf32>
    %184 = arith.mulf %182, %183 : vector<32x256xf32>
    %185 = tpu.concatenate %175, %178, %170, %181, %184, %8 in 0 : vector<32x256xf32>, vector<32x256xf32>, vector<32x256xf32>, vector<32x256xf32>, vector<32x256xf32>, vector<1x256xf32> -> vector<161x256xf32>
    %cst_88 = arith.constant dense<0.000000e+00> : vector<32x256xf32>
    %186 = tpu.matmul %172, %185, %cst_88 {dimension_numbers = #tpu.dot_dimension_numbers<[1], [0], [0], [1], [0, 0, 1, 1], [], []>} : vector<32x161xf32>, vector<161x256xf32>, vector<32x256xf32> -> vector<32x256xf32>
    %cst_89 = arith.constant 0.000000e+00 : f32
    %187 = vector.broadcast %cst_89 : f32 to vector<32x256xf32>
    %188 = arith.maximumf %186, %187 : vector<32x256xf32>
    %c0_90 = arith.constant 0 : index
    %c0_91 = arith.constant 0 : index
    %189 = vector.load %arg5[%c0_90, %c0_91] : memref<4x161xf32, #tpu.memory_space<vmem>>, vector<4x161xf32>
    %c2_i32_92 = arith.constant 2 : i32
    %190 = tpu.dynamic_rotate %188 by %c2_i32_92 dim 1 : vector<32x256xf32>, i32 -> vector<32x256xf32>
    %191 = vector.broadcast %1 : vector<1x256xf32> to vector<32x256xf32>
    %192 = arith.mulf %190, %191 : vector<32x256xf32>
    %c1_i32_93 = arith.constant 1 : i32
    %193 = tpu.dynamic_rotate %188 by %c1_i32_93 dim 1 : vector<32x256xf32>, i32 -> vector<32x256xf32>
    %194 = vector.broadcast %3 : vector<1x256xf32> to vector<32x256xf32>
    %195 = arith.mulf %193, %194 : vector<32x256xf32>
    %c255_i32_94 = arith.constant 255 : i32
    %196 = tpu.dynamic_rotate %188 by %c255_i32_94 dim 1 : vector<32x256xf32>, i32 -> vector<32x256xf32>
    %197 = vector.broadcast %5 : vector<1x256xf32> to vector<32x256xf32>
    %198 = arith.mulf %196, %197 : vector<32x256xf32>
    %c254_i32_95 = arith.constant 254 : i32
    %199 = tpu.dynamic_rotate %188 by %c254_i32_95 dim 1 : vector<32x256xf32>, i32 -> vector<32x256xf32>
    %200 = vector.broadcast %7 : vector<1x256xf32> to vector<32x256xf32>
    %201 = arith.mulf %199, %200 : vector<32x256xf32>
    %202 = tpu.concatenate %192, %195, %188, %198, %201, %8 in 0 : vector<32x256xf32>, vector<32x256xf32>, vector<32x256xf32>, vector<32x256xf32>, vector<32x256xf32>, vector<1x256xf32> -> vector<161x256xf32>
    %cst_96 = arith.constant dense<0.000000e+00> : vector<4x256xf32>
    %203 = tpu.matmul %189, %202, %cst_96 {dimension_numbers = #tpu.dot_dimension_numbers<[1], [0], [0], [1], [0, 0, 1, 1], [], []>} : vector<4x161xf32>, vector<161x256xf32>, vector<4x256xf32> -> vector<4x256xf32>
    %c0_97 = arith.constant 0 : index
    %c0_98 = arith.constant 0 : index
    %204 = vector.load %arg6[%c0_97, %c0_98] : memref<4x256xf32, #tpu.memory_space<vmem>>, vector<4x256xf32>
    tpu.vector_store %arg6[%c0_97, %c0_98], %203 {strides = array<i32>} : memref<4x256xf32, #tpu.memory_space<vmem>>, vector<4x256xf32>,
    return
  }
  func.func @transform_0(%arg0: i32) -> (i32, i32) {
    %c0_i32 = arith.constant 0 : i32
    %c0_i32_0 = arith.constant 0 : i32
    return %c0_i32, %arg0 : i32, i32
  }
  func.func @transform_1(%arg0: i32) -> (i32, i32, i32) {
    %c0_i32 = arith.constant 0 : i32
    %c0_i32_0 = arith.constant 0 : i32
    %c0_i32_1 = arith.constant 0 : i32
    %c0_i32_2 = arith.constant 0 : i32
    return %c0_i32, %c0_i32_0, %c0_i32_1 : i32, i32, i32
  }
  func.func @transform_2(%arg0: i32) -> (i32, i32) {
    %c0_i32 = arith.constant 0 : i32
    %c0_i32_0 = arith.constant 0 : i32
    %c0_i32_1 = arith.constant 0 : i32
    return %c0_i32, %c0_i32_0 : i32, i32
  }
  func.func @transform_3(%arg0: i32) -> (i32, i32, i32) {
    %c0_i32 = arith.constant 0 : i32
    %c0_i32_0 = arith.constant 0 : i32
    %c0_i32_1 = arith.constant 0 : i32
    %c0_i32_2 = arith.constant 0 : i32
    return %c0_i32, %c0_i32_0, %c0_i32_1 : i32, i32, i32
  }
  func.func @transform_4(%arg0: i32) -> (i32, i32) {
    %c0_i32 = arith.constant 0 : i32
    %c0_i32_0 = arith.constant 0 : i32
    %c0_i32_1 = arith.constant 0 : i32
    return %c0_i32, %c0_i32_0 : i32, i32
  }
  func.func @transform_5(%arg0: i32) -> (i32, i32) {
    %c0_i32 = arith.constant 0 : i32
    %c0_i32_0 = arith.constant 0 : i32
    return %c0_i32, %arg0 : i32, i32
  }
}

</mosaic_0001>

<llo_original>
// kernel: network11_pallas.1
$region0: #{network11_pallas.1}
  #allocation0 [shape = 'u32[]', space=smem, size = 0x4, offset = 0x4, fixed_abs, tag = 'smem constant byte address 0x4 - core index']
  #allocation1 [shape = 'u32[144,128]{1,0:T(1,128)}', space=vmem, size = 0x12000, scoped, tag = 'internal scratch']
  %s0 = inlined_call_operand.vmem [shape: f32[4,256], index: 0, kind: input, shape index: {}]
  %s1 = inlined_call_operand.vmem [shape: f32[5,1,256], index: 1, kind: input, shape index: {}]
  %s2 = inlined_call_operand.vmem [shape: f32[32,21], index: 2, kind: input, shape index: {}]
  %s3 = inlined_call_operand.vmem [shape: f32[9,32,161], index: 3, kind: input, shape index: {}]
  %s4 = inlined_call_operand.vmem [shape: f32[4,161], index: 4, kind: input, shape index: {}]
  %s5 = inlined_call_operand.vmem [shape: f32[4,256], index: 5, kind: output, shape index: {}]
  %s6 = sld [smem:[#allocation0]]
  $region30: #{network11_pallas.1} parent=0
    _
  %s8 = ssub.s32 1, %s6
  %s9 = scalar_select 0, %s8, %s6
  // Predicated region
  $region2: #{network11_pallas.1} parent=0 // pred_check
    _
  $region3: #{network11_pallas.1} parent=0 // pred_check_branch
    %11 = sbr.rel (0) target = $region5
  $region4: #{network11_pallas.1} parent=0 // pred_region
    _
  $region5: #{network11_pallas.1} parent=0 // pred_fallthru
    _
  // Predicated region
  $region6: #{network11_pallas.1} parent=0 // pred_check
    _
  $region7: #{network11_pallas.1} parent=0 // pred_check_branch
    %13 = sbr.rel (0) target = $region9
  $region8: #{network11_pallas.1} parent=0 // pred_region
    _
  $region9: #{network11_pallas.1} parent=0 // pred_fallthru
    _
  // Predicated region
  $region10: #{network11_pallas.1} parent=0 // pred_check
    _
  $region11: #{network11_pallas.1} parent=0 // pred_check_branch
    %15 = sbr.rel (0) target = $region13
  $region12: #{network11_pallas.1} parent=0 // pred_region
    _
  $region13: #{network11_pallas.1} parent=0 // pred_fallthru
    _
  // Predicated region
  $region14: #{network11_pallas.1} parent=0 // pred_check
    _
  $region15: #{network11_pallas.1} parent=0 // pred_check_branch
    %17 = sbr.rel (0) target = $region17
  $region16: #{network11_pallas.1} parent=0 // pred_region
    _
  $region17: #{network11_pallas.1} parent=0 // pred_fallthru
    _
  // Predicated region
  $region18: #{network11_pallas.1} parent=0 // pred_check
    _
  $region19: #{network11_pallas.1} parent=0 // pred_check_branch
    %19 = sbr.rel (0) target = $region21
  $region20: #{network11_pallas.1} parent=0 // pred_region
    _
  $region21: #{network11_pallas.1} parent=0 // pred_fallthru
    _
  %v20 = vld [vmem:[%s1] sm:$0x3]
  %s21 = scalar_lea.vmem %s1, 2
  %v22 = vld [vmem:[%s21] sm:$0x3]
  %s23 = scalar_lea.vmem %s1, 6
  %v24 = vld [vmem:[%s23] sm:$0x3]
  %s25 = scalar_lea.vmem %s1, 8
  %v26 = vld [vmem:[%s25] sm:$0x3]
  %v27 = vld [vmem:[%s0] sm:$0xff]
  %v28 = vld [vmem:[%s2] sm:$0xff]
  %v29 = vld [vmem:[%s2 + $0x8] sm:$0xff]
  %v30 = vld [vmem:[%s2 + $0x10] sm:$0xff]
  %v31 = vld [vmem:[%s2 + $0x18] sm:$0xff]
  %v33 = vcombine.high %v27, %v27
  %35 = vrot.lane.b32.xlu0 %v27, 2
  %v36 = vpop.permute.xlu0 %35
  %37 = vrot.lane.b32.xlu0 %v33, 2
  %v38 = vpop.permute.xlu0 %37
  %v39 = vlaneseq
  %v40 = vand.u32 %v39, 127
  %vm41 = vcmp.lt.s32.totalorder %v40, 2
  %v42 = vsel %vm41, %v36, %v38
  %v43 = vsel %vm41, %v38, %v36
  %v45 = vlaneseq
  %v46 = vshrl.u32 %v45, 7
  %v47 = vsub.s32 0, %v46
  %v48 = vrot.slane %v20, %v47
  %v49 = vlaneseq
  %v50 = vshrl.u32 %v49, 7
  %v51 = vsub.s32 1, %v50
  %v52 = vrot.slane %v20, %v51
  %v55 = vmul.f32 %v43, %v48
  %v56 = vmul.f32 %v42, %v52
  %57 = vrot.lane.b32.xlu0 %v27, 1
  %v58 = vpop.permute.xlu0 %57
  %59 = vrot.lane.b32.xlu0 %v33, 1
  %v60 = vpop.permute.xlu0 %59
  %vm61 = vcmp.lt.s32.totalorder %v40, 1
  %v62 = vsel %vm61, %v58, %v60
  %v63 = vsel %vm61, %v60, %v58
  %v65 = vlaneseq
  %v66 = vshrl.u32 %v65, 7
  %v67 = vsub.s32 0, %v66
  %v68 = vrot.slane %v22, %v67
  %v69 = vlaneseq
  %v70 = vshrl.u32 %v69, 7
  %v71 = vsub.s32 1, %v70
  %v72 = vrot.slane %v22, %v71
  %v75 = vmul.f32 %v63, %v68
  %v76 = vmul.f32 %v62, %v72
  %77 = vrot.lane.b32.xlu0 %v27, 127
  %v78 = vpop.permute.xlu0 %77
  %79 = vrot.lane.b32.xlu0 %v33, 127
  %v80 = vpop.permute.xlu0 %79
  %vm81 = vcmp.lt.s32.totalorder %v40, 127
  %v82 = vsel %vm81, %v78, %v80
  %v83 = vsel %vm81, %v80, %v78
  %v85 = vlaneseq
  %v86 = vshrl.u32 %v85, 7
  %v87 = vsub.s32 0, %v86
  %v88 = vrot.slane %v24, %v87
  %v89 = vlaneseq
  %v90 = vshrl.u32 %v89, 7
  %v91 = vsub.s32 1, %v90
  %v92 = vrot.slane %v24, %v91
  %v95 = vmul.f32 %v82, %v88
  %v96 = vmul.f32 %v83, %v92
  %97 = vrot.lane.b32.xlu0 %v27, 126
  %v98 = vpop.permute.xlu0 %97
  %99 = vrot.lane.b32.xlu0 %v33, 126
  %v100 = vpop.permute.xlu0 %99
  %vm101 = vcmp.lt.s32.totalorder %v40, 126
  %v102 = vsel %vm101, %v98, %v100
  %v103 = vsel %vm101, %v100, %v98
  %v105 = vlaneseq
  %v106 = vshrl.u32 %v105, 7
  %v107 = vsub.s32 0, %v106
  %v108 = vrot.slane %v26, %v107
  %v109 = vlaneseq
  %v110 = vshrl.u32 %v109, 7
  %v111 = vsub.s32 1, %v110
  %v112 = vrot.slane %v26, %v111
  %v115 = vmul.f32 %v102, %v108
  %v116 = vmul.f32 %v103, %v112
  %v119 = vrot.slane %v75, 4
  %v120 = vrot.slane %v76, 4
  %v125 = vrot.slane %v95, 4
  %v126 = vrot.slane %v96, 4
  %vm129 = vcmask 1043456
  %v130 = vsel %vm129, %v55, %v119
  %v131 = vsel %vm129, %v56, %v120
  %v132 = vsel %vm129, %v27, %v125
  %v133 = vsel %vm129, %v33, %v126
  %v134 = vsel %vm129, %v115, 1.0
  %v135 = vsel %vm129, %v116, 1.0
  %vm136 = vcmask 171008
  %v138 = vsel %vm136, %v28, 0
  %v141 = vsel %vm136, %v29, 0
  %v144 = vsel %vm136, %v30, 0
  %v147 = vsel %vm136, %v31, 0
  %vm149 = vcmask 1044480
  %v151 = vsel %vm149, %v134, 0
  %v154 = vsel %vm149, %v135, 0
  %156 = vmatprep.subr.mxu0 %v131
  %157 = vmatpush1.msra.mxu0 %v130
  %158 = vmatprep.subr.mxu0 %v133
  %159 = vmatpush1.msra.mxu0 %v132
  %160 = vmatprep.subr.mxu0 %v154
  %161 = vmatpush1.msra.mxu0 %v151
  %162 = vmatprep.subr.mxu0 0.0
  %163 = vmatpush1.msra.mxu0 0.0
  %164 = vmatprep.subr.mxu0 0.0
  %165 = vmatpush1.msra.mxu0 0.0
  %166 = vmatprep.subr.mxu0 0.0
  %167 = vmatpush1.msra.mxu0 0.0
  %168 = vmatprep.subr.mxu0 0.0
  %169 = vmatpush1.msra.mxu0 0.0
  %170 = vmatprep.subr.mxu0 0.0
  %171 = vmatpush1.msra.mxu0 0.0
  %172 = vmatprep.subr.mxu0 0.0
  %173 = vmatpush1.msra.mxu0 0.0
  %174 = vmatprep.subr.mxu0 0.0
  %175 = vmatpush1.msra.mxu0 0.0
  %176 = vmatprep.subr.mxu0 0.0
  %177 = vmatpush1.msra.mxu0 0.0
  %178 = vmatprep.subr.mxu0 0.0
  %179 = vmatpush1.msra.mxu0 0.0
  %180 = vmatprep.subr.mxu0 0.0
  %181 = vmatpush1.msra.mxu0 0.0
  %182 = vmatprep.subr.mxu0 0.0
  %183 = vmatpush1.msra.mxu0 0.0
  %184 = vmatprep.subr.mxu0 0.0
  %185 = vmatpush1.msra.mxu0 0.0
  %186 = vmatprep.subr.mxu0 0.0
  %187 = vmatpush1.msra.mxu0 0.0
  %188 = vmatprep.subr.mxu0 0.0
  %189 = vmatpush1.msra.mxu0 0.0
  %190 = vmatprep.subr.mxu0 0.0
  %191 = vmatpush1.msra.mxu0 0.0
  %192 = vmatprep.subr.mxu0 0.0
  %193 = vmatpush1.msra.mxu0 0.0
  %194 = vmatprep.subr.mxu0 0.0
  %195 = vmatpush1.msra.mxu0 0.0
  %196 = vmatprep.subr.mxu0 0.0
  %197 = vmatpush1.msra.mxu0 0.0
  %198 = vmatprep.subr.mxu0 0.0
  %199 = vmatpush1.msra.mxu0 0.0
  %200 = vmatprep.subr.mxu0 0.0
  %201 = vmatpush1.msra.mxu0 0.0
  %202 = vmatprep.subr.mxu0 0.0
  %203 = vmatpush1.msra.mxu0 0.0
  %204 = vmatprep.subr.mxu0 0.0
  %205 = vmatpush1.msra.mxu0 0.0
  %206 = vmatprep.subr.mxu0 0.0
  %207 = vmatpush1.msra.mxu0 0.0
  %208 = vmatprep.subr.mxu0 0.0
  %209 = vmatpush1.msra.mxu0 0.0
  %210 = vmatprep.subr.mxu0 0.0
  %211 = vmatpush1.msra.mxu0 0.0
  %212 = vmatprep.subr.mxu0 0.0
  %213 = vmatpush1.msra.mxu0 0.0
  %214 = vmatprep.subr.mxu0 0.0
  %215 = vmatpush1.msra.mxu0 0.0
  %216 = vmatprep.subr.mxu0 0.0
  %217 = vmatpush1.msra.mxu0 0.0
  %218 = vmatprep.subr.mxu0 0.0
  %219 = vmatpush1.msra.mxu0 0.0
  %220 = vmatprep.mubr.f32.mxu0 0.0
  %221 = vmatmul.mubr.f32.gmra.mrb[0].mxu0 %v138
  %v222 = vpop.f32.mrb[0].mxu0
  %v223 = vadd.f32 0.0, %v222
  %v224 = vpop.f32.mrb[0].mxu0
  %v225 = vadd.f32 0.0, %v224
  %226 = vmatprep.mubr.f32.mxu0 0.0
  %227 = vmatmul.mubr.f32.gmra.mrb[0].mxu0 %v141
  %v228 = vpop.f32.mrb[0].mxu0
  %v229 = vadd.f32 0.0, %v228
  %v230 = vpop.f32.mrb[0].mxu0
  %v231 = vadd.f32 0.0, %v230
  %232 = vmatprep.mubr.f32.mxu0 0.0
  %233 = vmatmul.mubr.f32.gmra.mrb[0].mxu0 %v144
  %v234 = vpop.f32.mrb[0].mxu0
  %v235 = vadd.f32 0.0, %v234
  %v236 = vpop.f32.mrb[0].mxu0
  %v237 = vadd.f32 0.0, %v236
  %238 = vmatprep.mubr.f32.mxu0 0.0
  %239 = vmatmul.mubr.f32.gmra.mrb[0].mxu0 %v147
  %v240 = vpop.f32.mrb[0].mxu0
  %v241 = vadd.f32 0.0, %v240
  %v242 = vpop.f32.mrb[0].mxu0
  %v243 = vadd.f32 0.0, %v242
  %244 = vdwg.mxu0
  %v245 = vmax.f32 %v223, 0.0
  %v246 = vmax.f32 %v225, 0.0
  %v247 = vmax.f32 %v229, 0.0
  %v248 = vmax.f32 %v231, 0.0
  %v249 = vmax.f32 %v235, 0.0
  %v250 = vmax.f32 %v237, 0.0
  %v251 = vmax.f32 %v241, 0.0
  %v252 = vmax.f32 %v243, 0.0
  %v253 = vld [vmem:[%s3] sm:$0xff]
  %v254 = vld [vmem:[%s3 + $0x8] sm:$0xff]
  %v255 = vld [vmem:[%s3 + $0x10] sm:$0xff]
  %v256 = vld [vmem:[%s3 + $0x18] sm:$0xff]
  %v257 = vld [vmem:[%s3 + $0x20] sm:$0xff]
  %v258 = vld [vmem:[%s3 + $0x28] sm:$0xff]
  %v259 = vld [vmem:[%s3 + $0x30] sm:$0xff]
  %v260 = vld [vmem:[%s3 + $0x38] sm:$0xff]
  %261 = vrot.lane.b32.xlu0 %v245, 2
  %v262 = vpop.permute.xlu0 %261
  %263 = vrot.lane.b32.xlu0 %v247, 2
  %v264 = vpop.permute.xlu0 %263
  %265 = vrot.lane.b32.xlu0 %v249, 2
  %v266 = vpop.permute.xlu0 %265
  %267 = vrot.lane.b32.xlu0 %v251, 2
  %v268 = vpop.permute.xlu0 %267
  %269 = vrot.lane.b32.xlu0 %v246, 2
  %v270 = vpop.permute.xlu0 %269
  %271 = vrot.lane.b32.xlu0 %v248, 2
  %v272 = vpop.permute.xlu0 %271
  %273 = vrot.lane.b32.xlu0 %v250, 2
  %v274 = vpop.permute.xlu0 %273
  %275 = vrot.lane.b32.xlu0 %v252, 2
  %v276 = vpop.permute.xlu0 %275
  %v277 = vsel %vm41, %v262, %v270
  %v278 = vsel %vm41, %v264, %v272
  %v279 = vsel %vm41, %v266, %v274
  %v280 = vsel %vm41, %v268, %v276
  %v281 = vsel %vm41, %v270, %v262
  %v282 = vsel %vm41, %v272, %v264
  %v283 = vsel %vm41, %v274, %v266
  %v284 = vsel %vm41, %v276, %v268
  %v285 = vmul.f32 %v281, %v48
  %v286 = vmul.f32 %v277, %v52
  %v287 = vmul.f32 %v282, %v48
  %v288 = vmul.f32 %v278, %v52
  %v289 = vmul.f32 %v283, %v48
  %v290 = vmul.f32 %v279, %v52
  %v291 = vmul.f32 %v284, %v48
  %v292 = vmul.f32 %v280, %v52
  %293 = vrot.lane.b32.xlu0 %v245, 1
  %v294 = vpop.permute.xlu0 %293
  %295 = vrot.lane.b32.xlu0 %v247, 1
  %v296 = vpop.permute.xlu0 %295
  %297 = vrot.lane.b32.xlu0 %v249, 1
  %v298 = vpop.permute.xlu0 %297
  %299 = vrot.lane.b32.xlu0 %v251, 1
  %v300 = vpop.permute.xlu0 %299
  %301 = vrot.lane.b32.xlu0 %v246, 1
  %v302 = vpop.permute.xlu0 %301
  %303 = vrot.lane.b32.xlu0 %v248, 1
  %v304 = vpop.permute.xlu0 %303
  %305 = vrot.lane.b32.xlu0 %v250, 1
  %v306 = vpop.permute.xlu0 %305
  %307 = vrot.lane.b32.xlu0 %v252, 1
  %v308 = vpop.permute.xlu0 %307
  %v309 = vsel %vm61, %v294, %v302
  %v310 = vsel %vm61, %v296, %v304
  %v311 = vsel %vm61, %v298, %v306
  %v312 = vsel %vm61, %v300, %v308
  %v313 = vsel %vm61, %v302, %v294
  %v314 = vsel %vm61, %v304, %v296
  %v315 = vsel %vm61, %v306, %v298
  %v316 = vsel %vm61, %v308, %v300
  %v317 = vmul.f32 %v313, %v68
  %v318 = vmul.f32 %v309, %v72
  %v319 = vmul.f32 %v314, %v68
  %v320 = vmul.f32 %v310, %v72
  %v321 = vmul.f32 %v315, %v68
  %v322 = vmul.f32 %v311, %v72
  %v323 = vmul.f32 %v316, %v68
  %v324 = vmul.f32 %v312, %v72
  %325 = vrot.lane.b32.xlu0 %v245, 127
  %v326 = vpop.permute.xlu0 %325
  %327 = vrot.lane.b32.xlu0 %v247, 127
  %v328 = vpop.permute.xlu0 %327
  %329 = vrot.lane.b32.xlu0 %v249, 127
  %v330 = vpop.permute.xlu0 %329
  %331 = vrot.lane.b32.xlu0 %v251, 127
  %v332 = vpop.permute.xlu0 %331
  %333 = vrot.lane.b32.xlu0 %v246, 127
  %v334 = vpop.permute.xlu0 %333
  %335 = vrot.lane.b32.xlu0 %v248, 127
  %v336 = vpop.permute.xlu0 %335
  %337 = vrot.lane.b32.xlu0 %v250, 127
  %v338 = vpop.permute.xlu0 %337
  %339 = vrot.lane.b32.xlu0 %v252, 127
  %v340 = vpop.permute.xlu0 %339
  %v341 = vsel %vm81, %v326, %v334
  %v342 = vsel %vm81, %v328, %v336
  %v343 = vsel %vm81, %v330, %v338
  %v344 = vsel %vm81, %v332, %v340
  %v345 = vsel %vm81, %v334, %v326
  %v346 = vsel %vm81, %v336, %v328
  %v347 = vsel %vm81, %v338, %v330
  %v348 = vsel %vm81, %v340, %v332
  %v349 = vmul.f32 %v341, %v88
  %v350 = vmul.f32 %v345, %v92
  %v351 = vmul.f32 %v342, %v88
  %v352 = vmul.f32 %v346, %v92
  %v353 = vmul.f32 %v343, %v88
  %v354 = vmul.f32 %v347, %v92
  %v355 = vmul.f32 %v344, %v88
  %v356 = vmul.f32 %v348, %v92
  %357 = vrot.lane.b32.xlu0 %v245, 126
  %v358 = vpop.permute.xlu0 %357
  %359 = vrot.lane.b32.xlu0 %v247, 126
  %v360 = vpop.permute.xlu0 %359
  %361 = vrot.lane.b32.xlu0 %v249, 126
  %v362 = vpop.permute.xlu0 %361
  %363 = vrot.lane.b32.xlu0 %v251, 126
  %v364 = vpop.permute.xlu0 %363
  %365 = vrot.lane.b32.xlu0 %v246, 126
  %v366 = vpop.permute.xlu0 %365
  %367 = vrot.lane.b32.xlu0 %v248, 126
  %v368 = vpop.permute.xlu0 %367
  %369 = vrot.lane.b32.xlu0 %v250, 126
  %v370 = vpop.permute.xlu0 %369
  %371 = vrot.lane.b32.xlu0 %v252, 126
  %v372 = vpop.permute.xlu0 %371
  %v373 = vsel %vm101, %v358, %v366
  %v374 = vsel %vm101, %v360, %v368
  %v375 = vsel %vm101, %v362, %v370
  %v376 = vsel %vm101, %v364, %v372
  %v377 = vsel %vm101, %v366, %v358
  %v378 = vsel %vm101, %v368, %v360
  %v379 = vsel %vm101, %v370, %v362
  %v380 = vsel %vm101, %v372, %v364
  %v381 = vmul.f32 %v373, %v108
  %v382 = vmul.f32 %v377, %v112
  %v383 = vmul.f32 %v374, %v108
  %v384 = vmul.f32 %v378, %v112
  %v385 = vmul.f32 %v375, %v108
  %v386 = vmul.f32 %v379, %v112
  %v387 = vmul.f32 %v376, %v108
  %v388 = vmul.f32 %v380, %v112
  %vm389 = vcmask 269312
  %v391 = vsel %vm389, %v254, 0
  %v394 = vsel %vm389, %v256, 0
  %v397 = vsel %vm389, %v258, 0
  %v400 = vsel %vm389, %v260, 0
  %vm402 = vcmask 1040384
  %v404 = vsel %vm402, 1.0, 0
  %406 = vmatprep.subr.mxu0 %v286
  %407 = vmatpush1.msra.mxu0 %v285
  %408 = vmatprep.subr.mxu0 %v288
  %409 = vmatpush1.msra.mxu0 %v287
  %410 = vmatprep.subr.mxu0 %v290
  %411 = vmatpush1.msra.mxu0 %v289
  %412 = vmatprep.subr.mxu0 %v292
  %413 = vmatpush1.msra.mxu0 %v291
  %414 = vmatprep.subr.mxu0 %v318
  %415 = vmatpush1.msra.mxu0 %v317
  %416 = vmatprep.subr.mxu0 %v320
  %417 = vmatpush1.msra.mxu0 %v319
  %418 = vmatprep.subr.mxu0 %v322
  %419 = vmatpush1.msra.mxu0 %v321
  %420 = vmatprep.subr.mxu0 %v324
  %421 = vmatpush1.msra.mxu0 %v323
  %422 = vmatprep.subr.mxu0 %v246
  %423 = vmatpush1.msra.mxu0 %v245
  %424 = vmatprep.subr.mxu0 %v248
  %425 = vmatpush1.msra.mxu0 %v247
  %426 = vmatprep.subr.mxu0 %v250
  %427 = vmatpush1.msra.mxu0 %v249
  %428 = vmatprep.subr.mxu0 %v252
  %429 = vmatpush1.msra.mxu0 %v251
  %430 = vmatprep.subr.mxu0 %v350
  %431 = vmatpush1.msra.mxu0 %v349
  %432 = vmatprep.subr.mxu0 %v352
  %433 = vmatpush1.msra.mxu0 %v351
  %434 = vmatprep.subr.mxu0 %v354
  %435 = vmatpush1.msra.mxu0 %v353
  %436 = vmatprep.subr.mxu0 %v356
  %437 = vmatpush1.msra.mxu0 %v355
  %438 = vmatprep.subr.mxu0 %v382
  %439 = vmatpush1.msra.mxu0 %v381
  %440 = vmatprep.subr.mxu0 %v384
  %441 = vmatpush1.msra.mxu0 %v383
  %442 = vmatprep.subr.mxu0 %v386
  %443 = vmatpush1.msra.mxu0 %v385
  %444 = vmatprep.subr.mxu0 %v388
  %445 = vmatpush1.msra.mxu0 %v387
  %446 = vmatprep.subr.mxu0 %v404
  %447 = vmatpush1.msra.mxu0 %v404
  %448 = vmatprep.subr.mxu0 0.0
  %449 = vmatpush1.msra.mxu0 0.0
  %450 = vmatprep.subr.mxu0 0.0
  %451 = vmatpush1.msra.mxu0 0.0
  %452 = vmatprep.subr.mxu0 0.0
  %453 = vmatpush1.msra.mxu0 0.0
  %454 = vmatprep.subr.mxu0 0.0
  %455 = vmatpush1.msra.mxu0 0.0
  %456 = vmatprep.subr.mxu0 0.0
  %457 = vmatpush1.msra.mxu0 0.0
  %458 = vmatprep.subr.mxu0 0.0
  %459 = vmatpush1.msra.mxu0 0.0
  %460 = vmatprep.subr.mxu0 0.0
  %461 = vmatpush1.msra.mxu0 0.0
  %462 = vmatprep.subr.mxu0 0.0
  %463 = vmatpush1.msra.mxu0 0.0
  %464 = vmatprep.subr.mxu0 0.0
  %465 = vmatpush1.msra.mxu0 0.0
  %466 = vmatprep.subr.mxu0 0.0
  %467 = vmatpush1.msra.mxu0 0.0
  %468 = vmatprep.subr.mxu0 0.0
  %469 = vmatpush1.msra.mxu0 0.0
  %470 = vmatprep.mubr.f32.mxu0 %v391
  %471 = vmatmul.mubr.f32.gmra.mrb[0].mxu0 %v253
  %v472 = vpop.f32.mrb[0].mxu0
  %v473 = vadd.f32 0.0, %v472
  %v474 = vpop.f32.mrb[0].mxu0
  %v475 = vadd.f32 0.0, %v474
  %476 = vmatprep.mubr.f32.mxu0 %v394
  %477 = vmatmul.mubr.f32.gmra.mrb[0].mxu0 %v255
  %v478 = vpop.f32.mrb[0].mxu0
  %v479 = vadd.f32 0.0, %v478
  %v480 = vpop.f32.mrb[0].mxu0
  %v481 = vadd.f32 0.0, %v480
  %482 = vmatprep.mubr.f32.mxu0 %v397
  %483 = vmatmul.mubr.f32.gmra.mrb[0].mxu0 %v257
  %v484 = vpop.f32.mrb[0].mxu0
  %v485 = vadd.f32 0.0, %v484
  %v486 = vpop.f32.mrb[0].mxu0
  %v487 = vadd.f32 0.0, %v486
  %488 = vmatprep.mubr.f32.mxu0 %v400
  %489 = vmatmul.mubr.f32.gmra.mrb[0].mxu0 %v259
  %v490 = vpop.f32.mrb[0].mxu0
  %v491 = vadd.f32 0.0, %v490
  %v492 = vpop.f32.mrb[0].mxu0
  %v493 = vadd.f32 0.0, %v492
  %494 = vdwg.mxu0
  %v495 = vmax.f32 %v473, 0.0
  %v496 = vmax.f32 %v475, 0.0
  %v497 = vmax.f32 %v479, 0.0
  %v498 = vmax.f32 %v481, 0.0
  %v499 = vmax.f32 %v485, 0.0
  %v500 = vmax.f32 %v487, 0.0
  %v501 = vmax.f32 %v491, 0.0
  %v502 = vmax.f32 %v493, 0.0
  %s503 = scalar_lea.vmem %s3, 64
  %v504 = vld [vmem:[%s503] sm:$0xff]
  %v505 = vld [vmem:[%s503 + $0x8] sm:$0xff]
  %v506 = vld [vmem:[%s503 + $0x10] sm:$0xff]
  %v507 = vld [vmem:[%s503 + $0x18] sm:$0xff]
  %v508 = vld [vmem:[%s503 + $0x20] sm:$0xff]
  %v509 = vld [vmem:[%s503 + $0x28] sm:$0xff]
  %v510 = vld [vmem:[%s503 + $0x30] sm:$0xff]
  %v511 = vld [vmem:[%s503 + $0x38] sm:$0xff]
  %512 = vrot.lane.b32.xlu0 %v495, 2
  %v513 = vpop.permute.xlu0 %512
  %514 = vrot.lane.b32.xlu0 %v497, 2
  %v515 = vpop.permute.xlu0 %514
  %516 = vrot.lane.b32.xlu0 %v499, 2
  %v517 = vpop.permute.xlu0 %516
  %518 = vrot.lane.b32.xlu0 %v501, 2
  %v519 = vpop.permute.xlu0 %518
  %520 = vrot.lane.b32.xlu0 %v496, 2
  %v521 = vpop.permute.xlu0 %520
  %522 = vrot.lane.b32.xlu0 %v498, 2
  %v523 = vpop.permute.xlu0 %522
  %524 = vrot.lane.b32.xlu0 %v500, 2
  %v525 = vpop.permute.xlu0 %524
  %526 = vrot.lane.b32.xlu0 %v502, 2
  %v527 = vpop.permute.xlu0 %526
  %v528 = vsel %vm41, %v513, %v521
  %v529 = vsel %vm41, %v515, %v523
  %v530 = vsel %vm41, %v517, %v525
  %v531 = vsel %vm41, %v519, %v527
  %v532 = vsel %vm41, %v521, %v513
  %v533 = vsel %vm41, %v523, %v515
  %v534 = vsel %vm41, %v525, %v517
  %v535 = vsel %vm41, %v527, %v519
  %v536 = vmul.f32 %v532, %v48
  %v537 = vmul.f32 %v528, %v52
  %v538 = vmul.f32 %v533, %v48
  %v539 = vmul.f32 %v529, %v52
  %v540 = vmul.f32 %v534, %v48
  %v541 = vmul.f32 %v530, %v52
  %v542 = vmul.f32 %v535, %v48
  %v543 = vmul.f32 %v531, %v52
  %544 = vrot.lane.b32.xlu0 %v495, 1
  %v545 = vpop.permute.xlu0 %544
  %546 = vrot.lane.b32.xlu0 %v497, 1
  %v547 = vpop.permute.xlu0 %546
  %548 = vrot.lane.b32.xlu0 %v499, 1
  %v549 = vpop.permute.xlu0 %548
  %550 = vrot.lane.b32.xlu0 %v501, 1
  %v551 = vpop.permute.xlu0 %550
  %552 = vrot.lane.b32.xlu0 %v496, 1
  %v553 = vpop.permute.xlu0 %552
  %554 = vrot.lane.b32.xlu0 %v498, 1
  %v555 = vpop.permute.xlu0 %554
  %556 = vrot.lane.b32.xlu0 %v500, 1
  %v557 = vpop.permute.xlu0 %556
  %558 = vrot.lane.b32.xlu0 %v502, 1
  %v559 = vpop.permute.xlu0 %558
  %v560 = vsel %vm61, %v545, %v553
  %v561 = vsel %vm61, %v547, %v555
  %v562 = vsel %vm61, %v549, %v557
  %v563 = vsel %vm61, %v551, %v559
  %v564 = vsel %vm61, %v553, %v545
  %v565 = vsel %vm61, %v555, %v547
  %v566 = vsel %vm61, %v557, %v549
  %v567 = vsel %vm61, %v559, %v551
  %v568 = vmul.f32 %v564, %v68
  %v569 = vmul.f32 %v560, %v72
  %v570 = vmul.f32 %v565, %v68
  %v571 = vmul.f32 %v561, %v72
  %v572 = vmul.f32 %v566, %v68
  %v573 = vmul.f32 %v562, %v72
  %v574 = vmul.f32 %v567, %v68
  %v575 = vmul.f32 %v563, %v72
  %576 = vrot.lane.b32.xlu0 %v495, 127
  %v577 = vpop.permute.xlu0 %576
  %578 = vrot.lane.b32.xlu0 %v497, 127
  %v579 = vpop.permute.xlu0 %578
  %580 = vrot.lane.b32.xlu0 %v499, 127
  %v581 = vpop.permute.xlu0 %580
  %582 = vrot.lane.b32.xlu0 %v501, 127
  %v583 = vpop.permute.xlu0 %582
  %584 = vrot.lane.b32.xlu0 %v496, 127
  %v585 = vpop.permute.xlu0 %584
  %586 = vrot.lane.b32.xlu0 %v498, 127
  %v587 = vpop.permute.xlu0 %586
  %588 = vrot.lane.b32.xlu0 %v500, 127
  %v589 = vpop.permute.xlu0 %588
  %590 = vrot.lane.b32.xlu0 %v502, 127
  %v591 = vpop.permute.xlu0 %590
  %v592 = vsel %vm81, %v577, %v585
  %v593 = vsel %vm81, %v579, %v587
  %v594 = vsel %vm81, %v581, %v589
  %v595 = vsel %vm81, %v583, %v591
  %v596 = vsel %vm81, %v585, %v577
  %v597 = vsel %vm81, %v587, %v579
  %v598 = vsel %vm81, %v589, %v581
  %v599 = vsel %vm81, %v591, %v583
  %v600 = vmul.f32 %v592, %v88
  %v601 = vmul.f32 %v596, %v92
  %v602 = vmul.f32 %v593, %v88
  %v603 = vmul.f32 %v597, %v92
  %v604 = vmul.f32 %v594, %v88
  %v605 = vmul.f32 %v598, %v92
  %v606 = vmul.f32 %v595, %v88
  %v607 = vmul.f32 %v599, %v92
  %608 = vrot.lane.b32.xlu0 %v495, 126
  %v609 = vpop.permute.xlu0 %608
  %610 = vrot.lane.b32.xlu0 %v497, 126
  %v611 = vpop.permute.xlu0 %610
  %612 = vrot.lane.b32.xlu0 %v499, 126
  %v613 = vpop.permute.xlu0 %612
  %614 = vrot.lane.b32.xlu0 %v501, 126
  %v615 = vpop.permute.xlu0 %614
  %616 = vrot.lane.b32.xlu0 %v496, 126
  %v617 = vpop.permute.xlu0 %616
  %618 = vrot.lane.b32.xlu0 %v498, 126
  %v619 = vpop.permute.xlu0 %618
  %620 = vrot.lane.b32.xlu0 %v500, 126
  %v621 = vpop.permute.xlu0 %620
  %622 = vrot.lane.b32.xlu0 %v502, 126
  %v623 = vpop.permute.xlu0 %622
  %v624 = vsel %vm101, %v609, %v617
  %v625 = vsel %vm101, %v611, %v619
  %v626 = vsel %vm101, %v613, %v621
  %v627 = vsel %vm101, %v615, %v623
  %v628 = vsel %vm101, %v617, %v609
  %v629 = vsel %vm101, %v619, %v611
  %v630 = vsel %vm101, %v621, %v613
  %v631 = vsel %vm101, %v623, %v615
  %v632 = vmul.f32 %v624, %v108
  %v633 = vmul.f32 %v628, %v112
  %v634 = vmul.f32 %v625, %v108
  %v635 = vmul.f32 %v629, %v112
  %v636 = vmul.f32 %v626, %v108
  %v637 = vmul.f32 %v630, %v112
  %v638 = vmul.f32 %v627, %v108
  %v639 = vmul.f32 %v631, %v112
  %v641 = vsel %vm389, %v505, 0
  %v644 = vsel %vm389, %v507, 0
  %v647 = vsel %vm389, %v509, 0
  %v650 = vsel %vm389, %v511, 0
  %652 = vmatprep.subr.mxu0 %v537
  %653 = vmatpush1.msra.mxu0 %v536
  %654 = vmatprep.subr.mxu0 %v539
  %655 = vmatpush1.msra.mxu0 %v538
  %656 = vmatprep.subr.mxu0 %v541
  %657 = vmatpush1.msra.mxu0 %v540
  %658 = vmatprep.subr.mxu0 %v543
  %659 = vmatpush1.msra.mxu0 %v542
  %660 = vmatprep.subr.mxu0 %v569
  %661 = vmatpush1.msra.mxu0 %v568
  %662 = vmatprep.subr.mxu0 %v571
  %663 = vmatpush1.msra.mxu0 %v570
  %664 = vmatprep.subr.mxu0 %v573
  %665 = vmatpush1.msra.mxu0 %v572
  %666 = vmatprep.subr.mxu0 %v575
  %667 = vmatpush1.msra.mxu0 %v574
  %668 = vmatprep.subr.mxu0 %v496
  %669 = vmatpush1.msra.mxu0 %v495
  %670 = vmatprep.subr.mxu0 %v498
  %671 = vmatpush1.msra.mxu0 %v497
  %672 = vmatprep.subr.mxu0 %v500
  %673 = vmatpush1.msra.mxu0 %v499
  %674 = vmatprep.subr.mxu0 %v502
  %675 = vmatpush1.msra.mxu0 %v501
  %676 = vmatprep.subr.mxu0 %v601
  %677 = vmatpush1.msra.mxu0 %v600
  %678 = vmatprep.subr.mxu0 %v603
  %679 = vmatpush1.msra.mxu0 %v602
  %680 = vmatprep.subr.mxu0 %v605
  %681 = vmatpush1.msra.mxu0 %v604
  %682 = vmatprep.subr.mxu0 %v607
  %683 = vmatpush1.msra.mxu0 %v606
  %684 = vmatprep.subr.mxu0 %v633
  %685 = vmatpush1.msra.mxu0 %v632
  %686 = vmatprep.subr.mxu0 %v635
  %687 = vmatpush1.msra.mxu0 %v634
  %688 = vmatprep.subr.mxu0 %v637
  %689 = vmatpush1.msra.mxu0 %v636
  %690 = vmatprep.subr.mxu0 %v639
  %691 = vmatpush1.msra.mxu0 %v638
  %692 = vmatprep.subr.mxu0 %v404
  %693 = vmatpush1.msra.mxu0 %v404
  %694 = vmatprep.subr.mxu0 0.0
  %695 = vmatpush1.msra.mxu0 0.0
  %696 = vmatprep.subr.mxu0 0.0
  %697 = vmatpush1.msra.mxu0 0.0
  %698 = vmatprep.subr.mxu0 0.0
  %699 = vmatpush1.msra.mxu0 0.0
  %700 = vmatprep.subr.mxu0 0.0
  %701 = vmatpush1.msra.mxu0 0.0
  %702 = vmatprep.subr.mxu0 0.0
  %703 = vmatpush1.msra.mxu0 0.0
  %704 = vmatprep.subr.mxu0 0.0
  %705 = vmatpush1.msra.mxu0 0.0
  %706 = vmatprep.subr.mxu0 0.0
  %707 = vmatpush1.msra.mxu0 0.0
  %708 = vmatprep.subr.mxu0 0.0
  %709 = vmatpush1.msra.mxu0 0.0
  %710 = vmatprep.subr.mxu0 0.0
  %711 = vmatpush1.msra.mxu0 0.0
  %712 = vmatprep.subr.mxu0 0.0
  %713 = vmatpush1.msra.mxu0 0.0
  %714 = vmatprep.subr.mxu0 0.0
  %715 = vmatpush1.msra.mxu0 0.0
  %716 = vmatprep.mubr.f32.mxu0 %v641
  %717 = vmatmul.mubr.f32.gmra.mrb[0].mxu0 %v504
  %v718 = vpop.f32.mrb[0].mxu0
  %v719 = vadd.f32 0.0, %v718
  %v720 = vpop.f32.mrb[0].mxu0
  %v721 = vadd.f32 0.0, %v720
  %722 = vmatprep.mubr.f32.mxu0 %v644
  %723 = vmatmul.mubr.f32.gmra.mrb[0].mxu0 %v506
  %v724 = vpop.f32.mrb[0].mxu0
  %v725 = vadd.f32 0.0, %v724
  %v726 = vpop.f32.mrb[0].mxu0
  %v727 = vadd.f32 0.0, %v726
  %728 = vmatprep.mubr.f32.mxu0 %v647
  %729 = vmatmul.mubr.f32.gmra.mrb[0].mxu0 %v508
  %v730 = vpop.f32.mrb[0].mxu0
  %v731 = vadd.f32 0.0, %v730
  %v732 = vpop.f32.mrb[0].mxu0
  %v733 = vadd.f32 0.0, %v732
  %734 = vmatprep.mubr.f32.mxu0 %v650
  %735 = vmatmul.mubr.f32.gmra.mrb[0].mxu0 %v510
  %v736 = vpop.f32.mrb[0].mxu0
  %v737 = vadd.f32 0.0, %v736
  %v738 = vpop.f32.mrb[0].mxu0
  %v739 = vadd.f32 0.0, %v738
  %740 = vdwg.mxu0
  %v741 = vmax.f32 %v719, 0.0
  %v742 = vmax.f32 %v721, 0.0
  %v743 = vmax.f32 %v725, 0.0
  %v744 = vmax.f32 %v727, 0.0
  %v745 = vmax.f32 %v731, 0.0
  %v746 = vmax.f32 %v733, 0.0
  %v747 = vmax.f32 %v737, 0.0
  %v748 = vmax.f32 %v739, 0.0
  %s749 = scalar_lea.vmem %s3, 128
  %v750 = vld [vmem:[%s749] sm:$0xff]
  %v751 = vld [vmem:[%s749 + $0x8] sm:$0xff]
  %v752 = vld [vmem:[%s749 + $0x10] sm:$0xff]
  %v753 = vld [vmem:[%s749 + $0x18] sm:$0xff]
  %v754 = vld [vmem:[%s749 + $0x20] sm:$0xff]
  %v755 = vld [vmem:[%s749 + $0x28] sm:$0xff]
  %v756 = vld [vmem:[%s749 + $0x30] sm:$0xff]
  %v757 = vld [vmem:[%s749 + $0x38] sm:$0xff]
  %758 = vrot.lane.b32.xlu0 %v741, 2
  %v759 = vpop.permute.xlu0 %758
  %760 = vrot.lane.b32.xlu0 %v743, 2
  %v761 = vpop.permute.xlu0 %760
  %762 = vrot.lane.b32.xlu0 %v745, 2
  %v763 = vpop.permute.xlu0 %762
  %764 = vrot.lane.b32.xlu0 %v747, 2
  %v765 = vpop.permute.xlu0 %764
  %766 = vrot.lane.b32.xlu0 %v742, 2
  %v767 = vpop.permute.xlu0 %766
  %768 = vrot.lane.b32.xlu0 %v744, 2
  %v769 = vpop.permute.xlu0 %768
  %770 = vrot.lane.b32.xlu0 %v746, 2
  %v771 = vpop.permute.xlu0 %770
  %772 = vrot.lane.b32.xlu0 %v748, 2
  %v773 = vpop.permute.xlu0 %772
  %v774 = vsel %vm41, %v759, %v767
  %v775 = vsel %vm41, %v761, %v769
  %v776 = vsel %vm41, %v763, %v771
  %v777 = vsel %vm41, %v765, %v773
  %v778 = vsel %vm41, %v767, %v759
  %v779 = vsel %vm41, %v769, %v761
  %v780 = vsel %vm41, %v771, %v763
  %v781 = vsel %vm41, %v773, %v765
  %v782 = vmul.f32 %v778, %v48
  %v783 = vmul.f32 %v774, %v52
  %v784 = vmul.f32 %v779, %v48
  %v785 = vmul.f32 %v775, %v52
  %v786 = vmul.f32 %v780, %v48
  %v787 = vmul.f32 %v776, %v52
  %v788 = vmul.f32 %v781, %v48
  %v789 = vmul.f32 %v777, %v52
  %790 = vrot.lane.b32.xlu0 %v741, 1
  %v791 = vpop.permute.xlu0 %790
  %792 = vrot.lane.b32.xlu0 %v743, 1
  %v793 = vpop.permute.xlu0 %792
  %794 = vrot.lane.b32.xlu0 %v745, 1
  %v795 = vpop.permute.xlu0 %794
  %796 = vrot.lane.b32.xlu0 %v747, 1
  %v797 = vpop.permute.xlu0 %796
  %798 = vrot.lane.b32.xlu0 %v742, 1
  %v799 = vpop.permute.xlu0 %798
  %800 = vrot.lane.b32.xlu0 %v744, 1
  %v801 = vpop.permute.xlu0 %800
  %802 = vrot.lane.b32.xlu0 %v746, 1
  %v803 = vpop.permute.xlu0 %802
  %804 = vrot.lane.b32.xlu0 %v748, 1
  %v805 = vpop.permute.xlu0 %804
  %v806 = vsel %vm61, %v791, %v799
  %v807 = vsel %vm61, %v793, %v801
  %v808 = vsel %vm61, %v795, %v803
  %v809 = vsel %vm61, %v797, %v805
  %v810 = vsel %vm61, %v799, %v791
  %v811 = vsel %vm61, %v801, %v793
  %v812 = vsel %vm61, %v803, %v795
  %v813 = vsel %vm61, %v805, %v797
  %v814 = vmul.f32 %v810, %v68
  %v815 = vmul.f32 %v806, %v72
  %v816 = vmul.f32 %v811, %v68
  %v817 = vmul.f32 %v807, %v72
  %v818 = vmul.f32 %v812, %v68
  %v819 = vmul.f32 %v808, %v72
  %v820 = vmul.f32 %v813, %v68
  %v821 = vmul.f32 %v809, %v72
  %822 = vrot.lane.b32.xlu0 %v741, 127
  %v823 = vpop.permute.xlu0 %822
  %824 = vrot.lane.b32.xlu0 %v743, 127
  %v825 = vpop.permute.xlu0 %824
  %826 = vrot.lane.b32.xlu0 %v745, 127
  %v827 = vpop.permute.xlu0 %826
  %828 = vrot.lane.b32.xlu0 %v747, 127
  %v829 = vpop.permute.xlu0 %828
  %830 = vrot.lane.b32.xlu0 %v742, 127
  %v831 = vpop.permute.xlu0 %830
  %832 = vrot.lane.b32.xlu0 %v744, 127
  %v833 = vpop.permute.xlu0 %832
  %834 = vrot.lane.b32.xlu0 %v746, 127
  %v835 = vpop.permute.xlu0 %834
  %836 = vrot.lane.b32.xlu0 %v748, 127
  %v837 = vpop.permute.xlu0 %836
  %v838 = vsel %vm81, %v823, %v831
  %v839 = vsel %vm81, %v825, %v833
  %v840 = vsel %vm81, %v827, %v835
  %v841 = vsel %vm81, %v829, %v837
  %v842 = vsel %vm81, %v831, %v823
  %v843 = vsel %vm81, %v833, %v825
  %v844 = vsel %vm81, %v835, %v827
  %v845 = vsel %vm81, %v837, %v829
  %v846 = vmul.f32 %v838, %v88
  %v847 = vmul.f32 %v842, %v92
  %v848 = vmul.f32 %v839, %v88
  %v849 = vmul.f32 %v843, %v92
  %v850 = vmul.f32 %v840, %v88
  %v851 = vmul.f32 %v844, %v92
  %v852 = vmul.f32 %v841, %v88
  %v853 = vmul.f32 %v845, %v92
  %854 = vrot.lane.b32.xlu0 %v741, 126
  %v855 = vpop.permute.xlu0 %854
  %856 = vrot.lane.b32.xlu0 %v743, 126
  %v857 = vpop.permute.xlu0 %856
  %858 = vrot.lane.b32.xlu0 %v745, 126
  %v859 = vpop.permute.xlu0 %858
  %860 = vrot.lane.b32.xlu0 %v747, 126
  %v861 = vpop.permute.xlu0 %860
  %862 = vrot.lane.b32.xlu0 %v742, 126
  %v863 = vpop.permute.xlu0 %862
  %864 = vrot.lane.b32.xlu0 %v744, 126
  %v865 = vpop.permute.xlu0 %864
  %866 = vrot.lane.b32.xlu0 %v746, 126
  %v867 = vpop.permute.xlu0 %866
  %868 = vrot.lane.b32.xlu0 %v748, 126
  %v869 = vpop.permute.xlu0 %868
  %v870 = vsel %vm101, %v855, %v863
  %v871 = vsel %vm101, %v857, %v865
  %v872 = vsel %vm101, %v859, %v867
  %v873 = vsel %vm101, %v861, %v869
  %v874 = vsel %vm101, %v863, %v855
  %v875 = vsel %vm101, %v865, %v857
  %v876 = vsel %vm101, %v867, %v859
  %v877 = vsel %vm101, %v869, %v861
  %v878 = vmul.f32 %v870, %v108
  %v879 = vmul.f32 %v874, %v112
  %v880 = vmul.f32 %v871, %v108
  %v881 = vmul.f32 %v875, %v112
  %v882 = vmul.f32 %v872, %v108
  %v883 = vmul.f32 %v876, %v112
  %v884 = vmul.f32 %v873, %v108
  %v885 = vmul.f32 %v877, %v112
  %v887 = vsel %vm389, %v751, 0
  %v890 = vsel %vm389, %v753, 0
  %v893 = vsel %vm389, %v755, 0
  %v896 = vsel %vm389, %v757, 0
  %898 = vmatprep.subr.mxu0 %v783
  %899 = vmatpush1.msra.mxu0 %v782
  %900 = vmatprep.subr.mxu0 %v785
  %901 = vmatpush1.msra.mxu0 %v784
  %902 = vmatprep.subr.mxu0 %v787
  %903 = vmatpush1.msra.mxu0 %v786
  %904 = vmatprep.subr.mxu0 %v789
  %905 = vmatpush1.msra.mxu0 %v788
  %906 = vmatprep.subr.mxu0 %v815
  %907 = vmatpush1.msra.mxu0 %v814
  %908 = vmatprep.subr.mxu0 %v817
  %909 = vmatpush1.msra.mxu0 %v816
  %910 = vmatprep.subr.mxu0 %v819
  %911 = vmatpush1.msra.mxu0 %v818
  %912 = vmatprep.subr.mxu0 %v821
  %913 = vmatpush1.msra.mxu0 %v820
  %914 = vmatprep.subr.mxu0 %v742
  %915 = vmatpush1.msra.mxu0 %v741
  %916 = vmatprep.subr.mxu0 %v744
  %917 = vmatpush1.msra.mxu0 %v743
  %918 = vmatprep.subr.mxu0 %v746
  %919 = vmatpush1.msra.mxu0 %v745
  %920 = vmatprep.subr.mxu0 %v748
  %921 = vmatpush1.msra.mxu0 %v747
  %922 = vmatprep.subr.mxu0 %v847
  %923 = vmatpush1.msra.mxu0 %v846
  %924 = vmatprep.subr.mxu0 %v849
  %925 = vmatpush1.msra.mxu0 %v848
  %926 = vmatprep.subr.mxu0 %v851
  %927 = vmatpush1.msra.mxu0 %v850
  %928 = vmatprep.subr.mxu0 %v853
  %929 = vmatpush1.msra.mxu0 %v852
  %930 = vmatprep.subr.mxu0 %v879
  %931 = vmatpush1.msra.mxu0 %v878
  %932 = vmatprep.subr.mxu0 %v881
  %933 = vmatpush1.msra.mxu0 %v880
  %934 = vmatprep.subr.mxu0 %v883
  %935 = vmatpush1.msra.mxu0 %v882
  %936 = vmatprep.subr.mxu0 %v885
  %937 = vmatpush1.msra.mxu0 %v884
  %938 = vmatprep.subr.mxu0 %v404
  %939 = vmatpush1.msra.mxu0 %v404
  %940 = vmatprep.subr.mxu0 0.0
  %941 = vmatpush1.msra.mxu0 0.0
  %942 = vmatprep.subr.mxu0 0.0
  %943 = vmatpush1.msra.mxu0 0.0
  %944 = vmatprep.subr.mxu0 0.0
  %945 = vmatpush1.msra.mxu0 0.0
  %946 = vmatprep.subr.mxu0 0.0
  %947 = vmatpush1.msra.mxu0 0.0
  %948 = vmatprep.subr.mxu0 0.0
  %949 = vmatpush1.msra.mxu0 0.0
  %950 = vmatprep.subr.mxu0 0.0
  %951 = vmatpush1.msra.mxu0 0.0
  %952 = vmatprep.subr.mxu0 0.0
  %953 = vmatpush1.msra.mxu0 0.0
  %954 = vmatprep.subr.mxu0 0.0
  %955 = vmatpush1.msra.mxu0 0.0
  %956 = vmatprep.subr.mxu0 0.0
  %957 = vmatpush1.msra.mxu0 0.0
  %958 = vmatprep.subr.mxu0 0.0
  %959 = vmatpush1.msra.mxu0 0.0
  %960 = vmatprep.subr.mxu0 0.0
  %961 = vmatpush1.msra.mxu0 0.0
  %962 = vmatprep.mubr.f32.mxu0 %v887
  %963 = vmatmul.mubr.f32.gmra.mrb[0].mxu0 %v750
  %v964 = vpop.f32.mrb[0].mxu0
  %v965 = vadd.f32 0.0, %v964
  %v966 = vpop.f32.mrb[0].mxu0
  %v967 = vadd.f32 0.0, %v966
  %968 = vmatprep.mubr.f32.mxu0 %v890
  %969 = vmatmul.mubr.f32.gmra.mrb[0].mxu0 %v752
  %v970 = vpop.f32.mrb[0].mxu0
  %v971 = vadd.f32 0.0, %v970
  %v972 = vpop.f32.mrb[0].mxu0
  %v973 = vadd.f32 0.0, %v972
  %974 = vmatprep.mubr.f32.mxu0 %v893
  %975 = vmatmul.mubr.f32.gmra.mrb[0].mxu0 %v754
  %v976 = vpop.f32.mrb[0].mxu0
  %v977 = vadd.f32 0.0, %v976
  %v978 = vpop.f32.mrb[0].mxu0
  %v979 = vadd.f32 0.0, %v978
  %980 = vmatprep.mubr.f32.mxu0 %v896
  %981 = vmatmul.mubr.f32.gmra.mrb[0].mxu0 %v756
  %v982 = vpop.f32.mrb[0].mxu0
  %v983 = vadd.f32 0.0, %v982
  %v984 = vpop.f32.mrb[0].mxu0
  %v985 = vadd.f32 0.0, %v984
  %986 = vdwg.mxu0
  %v987 = vmax.f32 %v965, 0.0
  %v988 = vmax.f32 %v967, 0.0
  %v989 = vmax.f32 %v971, 0.0
  %v990 = vmax.f32 %v973, 0.0
  %v991 = vmax.f32 %v977, 0.0
  %v992 = vmax.f32 %v979, 0.0
  %v993 = vmax.f32 %v983, 0.0
  %v994 = vmax.f32 %v985, 0.0
  %s995 = scalar_lea.vmem %s3, 192
  %v996 = vld [vmem:[%s995] sm:$0xff]
  %v997 = vld [vmem:[%s995 + $0x8] sm:$0xff]
  %v998 = vld [vmem:[%s995 + $0x10] sm:$0xff]
  %v999 = vld [vmem:[%s995 + $0x18] sm:$0xff]
  %v1000 = vld [vmem:[%s995 + $0x20] sm:$0xff]
  %v1001 = vld [vmem:[%s995 + $0x28] sm:$0xff]
  %v1002 = vld [vmem:[%s995 + $0x30] sm:$0xff]
  %v1003 = vld [vmem:[%s995 + $0x38] sm:$0xff]
  %1004 = vrot.lane.b32.xlu0 %v987, 2
  %v1005 = vpop.permute.xlu0 %1004
  %1006 = vrot.lane.b32.xlu0 %v989, 2
  %v1007 = vpop.permute.xlu0 %1006
  %1008 = vrot.lane.b32.xlu0 %v991, 2
  %v1009 = vpop.permute.xlu0 %1008
  %1010 = vrot.lane.b32.xlu0 %v993, 2
  %v1011 = vpop.permute.xlu0 %1010
  %1012 = vrot.lane.b32.xlu0 %v988, 2
  %v1013 = vpop.permute.xlu0 %1012
  %1014 = vrot.lane.b32.xlu0 %v990, 2
  %v1015 = vpop.permute.xlu0 %1014
  %1016 = vrot.lane.b32.xlu0 %v992, 2
  %v1017 = vpop.permute.xlu0 %1016
  %1018 = vrot.lane.b32.xlu0 %v994, 2
  %v1019 = vpop.permute.xlu0 %1018
  %v1020 = vsel %vm41, %v1005, %v1013
  %v1021 = vsel %vm41, %v1007, %v1015
  %v1022 = vsel %vm41, %v1009, %v1017
  %v1023 = vsel %vm41, %v1011, %v1019
  %v1024 = vsel %vm41, %v1013, %v1005
  %v1025 = vsel %vm41, %v1015, %v1007
  %v1026 = vsel %vm41, %v1017, %v1009
  %v1027 = vsel %vm41, %v1019, %v1011
  %v1028 = vmul.f32 %v1024, %v48
  %v1029 = vmul.f32 %v1020, %v52
  %v1030 = vmul.f32 %v1025, %v48
  %v1031 = vmul.f32 %v1021, %v52
  %v1032 = vmul.f32 %v1026, %v48
  %v1033 = vmul.f32 %v1022, %v52
  %v1034 = vmul.f32 %v1027, %v48
  %v1035 = vmul.f32 %v1023, %v52
  %1036 = vrot.lane.b32.xlu0 %v987, 1
  %v1037 = vpop.permute.xlu0 %1036
  %1038 = vrot.lane.b32.xlu0 %v989, 1
  %v1039 = vpop.permute.xlu0 %1038
  %1040 = vrot.lane.b32.xlu0 %v991, 1
  %v1041 = vpop.permute.xlu0 %1040
  %1042 = vrot.lane.b32.xlu0 %v993, 1
  %v1043 = vpop.permute.xlu0 %1042
  %1044 = vrot.lane.b32.xlu0 %v988, 1
  %v1045 = vpop.permute.xlu0 %1044
  %1046 = vrot.lane.b32.xlu0 %v990, 1
  %v1047 = vpop.permute.xlu0 %1046
  %1048 = vrot.lane.b32.xlu0 %v992, 1
  %v1049 = vpop.permute.xlu0 %1048
  %1050 = vrot.lane.b32.xlu0 %v994, 1
  %v1051 = vpop.permute.xlu0 %1050
  %v1052 = vsel %vm61, %v1037, %v1045
  %v1053 = vsel %vm61, %v1039, %v1047
  %v1054 = vsel %vm61, %v1041, %v1049
  %v1055 = vsel %vm61, %v1043, %v1051
  %v1056 = vsel %vm61, %v1045, %v1037
  %v1057 = vsel %vm61, %v1047, %v1039
  %v1058 = vsel %vm61, %v1049, %v1041
  %v1059 = vsel %vm61, %v1051, %v1043
  %v1060 = vmul.f32 %v1056, %v68
  %v1061 = vmul.f32 %v1052, %v72
  %v1062 = vmul.f32 %v1057, %v68
  %v1063 = vmul.f32 %v1053, %v72
  %v1064 = vmul.f32 %v1058, %v68
  %v1065 = vmul.f32 %v1054, %v72
  %v1066 = vmul.f32 %v1059, %v68
  %v1067 = vmul.f32 %v1055, %v72
  %1068 = vrot.lane.b32.xlu0 %v987, 127
  %v1069 = vpop.permute.xlu0 %1068
  %1070 = vrot.lane.b32.xlu0 %v989, 127
  %v1071 = vpop.permute.xlu0 %1070
  %1072 = vrot.lane.b32.xlu0 %v991, 127
  %v1073 = vpop.permute.xlu0 %1072
  %1074 = vrot.lane.b32.xlu0 %v993, 127
  %v1075 = vpop.permute.xlu0 %1074
  %1076 = vrot.lane.b32.xlu0 %v988, 127
  %v1077 = vpop.permute.xlu0 %1076
  %1078 = vrot.lane.b32.xlu0 %v990, 127
  %v1079 = vpop.permute.xlu0 %1078
  %1080 = vrot.lane.b32.xlu0 %v992, 127
  %v1081 = vpop.permute.xlu0 %1080
  %1082 = vrot.lane.b32.xlu0 %v994, 127
  %v1083 = vpop.permute.xlu0 %1082
  %v1084 = vsel %vm81, %v1069, %v1077
  %v1085 = vsel %vm81, %v1071, %v1079
  %v1086 = vsel %vm81, %v1073, %v1081
  %v1087 = vsel %vm81, %v1075, %v1083
  %v1088 = vsel %vm81, %v1077, %v1069
  %v1089 = vsel %vm81, %v1079, %v1071
  %v1090 = vsel %vm81, %v1081, %v1073
  %v1091 = vsel %vm81, %v1083, %v1075
  %v1092 = vmul.f32 %v1084, %v88
  %v1093 = vmul.f32 %v1088, %v92
  %v1094 = vmul.f32 %v1085, %v88
  %v1095 = vmul.f32 %v1089, %v92
  %v1096 = vmul.f32 %v1086, %v88
  %v1097 = vmul.f32 %v1090, %v92
  %v1098 = vmul.f32 %v1087, %v88
  %v1099 = vmul.f32 %v1091, %v92
  %1100 = vrot.lane.b32.xlu0 %v987, 126
  %v1101 = vpop.permute.xlu0 %1100
  %1102 = vrot.lane.b32.xlu0 %v989, 126
  %v1103 = vpop.permute.xlu0 %1102
  %1104 = vrot.lane.b32.xlu0 %v991, 126
  %v1105 = vpop.permute.xlu0 %1104
  %1106 = vrot.lane.b32.xlu0 %v993, 126
  %v1107 = vpop.permute.xlu0 %1106
  %1108 = vrot.lane.b32.xlu0 %v988, 126
  %v1109 = vpop.permute.xlu0 %1108
  %1110 = vrot.lane.b32.xlu0 %v990, 126
  %v1111 = vpop.permute.xlu0 %1110
  %1112 = vrot.lane.b32.xlu0 %v992, 126
  %v1113 = vpop.permute.xlu0 %1112
  %1114 = vrot.lane.b32.xlu0 %v994, 126
  %v1115 = vpop.permute.xlu0 %1114
  %v1116 = vsel %vm101, %v1101, %v1109
  %v1117 = vsel %vm101, %v1103, %v1111
  %v1118 = vsel %vm101, %v1105, %v1113
  %v1119 = vsel %vm101, %v1107, %v1115
  %v1120 = vsel %vm101, %v1109, %v1101
  %v1121 = vsel %vm101, %v1111, %v1103
  %v1122 = vsel %vm101, %v1113, %v1105
  %v1123 = vsel %vm101, %v1115, %v1107
  %v1124 = vmul.f32 %v1116, %v108
  %v1125 = vmul.f32 %v1120, %v112
  %v1126 = vmul.f32 %v1117, %v108
  %v1127 = vmul.f32 %v1121, %v112
  %v1128 = vmul.f32 %v1118, %v108
  %v1129 = vmul.f32 %v1122, %v112
  %v1130 = vmul.f32 %v1119, %v108
  %v1131 = vmul.f32 %v1123, %v112
  %v1133 = vsel %vm389, %v997, 0
  %v1136 = vsel %vm389, %v999, 0
  %v1139 = vsel %vm389, %v1001, 0
  %v1142 = vsel %vm389, %v1003, 0
  %1144 = vmatprep.subr.mxu0 %v1029
  %1145 = vmatpush1.msra.mxu0 %v1028
  %1146 = vmatprep.subr.mxu0 %v1031
  %1147 = vmatpush1.msra.mxu0 %v1030
  %1148 = vmatprep.subr.mxu0 %v1033
  %1149 = vmatpush1.msra.mxu0 %v1032
  %1150 = vmatprep.subr.mxu0 %v1035
  %1151 = vmatpush1.msra.mxu0 %v1034
  %1152 = vmatprep.subr.mxu0 %v1061
  %1153 = vmatpush1.msra.mxu0 %v1060
  %1154 = vmatprep.subr.mxu0 %v1063
  %1155 = vmatpush1.msra.mxu0 %v1062
  %1156 = vmatprep.subr.mxu0 %v1065
  %1157 = vmatpush1.msra.mxu0 %v1064
  %1158 = vmatprep.subr.mxu0 %v1067
  %1159 = vmatpush1.msra.mxu0 %v1066
  %1160 = vmatprep.subr.mxu0 %v988
  %1161 = vmatpush1.msra.mxu0 %v987
  %1162 = vmatprep.subr.mxu0 %v990
  %1163 = vmatpush1.msra.mxu0 %v989
  %1164 = vmatprep.subr.mxu0 %v992
  %1165 = vmatpush1.msra.mxu0 %v991
  %1166 = vmatprep.subr.mxu0 %v994
  %1167 = vmatpush1.msra.mxu0 %v993
  %1168 = vmatprep.subr.mxu0 %v1093
  %1169 = vmatpush1.msra.mxu0 %v1092
  %1170 = vmatprep.subr.mxu0 %v1095
  %1171 = vmatpush1.msra.mxu0 %v1094
  %1172 = vmatprep.subr.mxu0 %v1097
  %1173 = vmatpush1.msra.mxu0 %v1096
  %1174 = vmatprep.subr.mxu0 %v1099
  %1175 = vmatpush1.msra.mxu0 %v1098
  %1176 = vmatprep.subr.mxu0 %v1125
  %1177 = vmatpush1.msra.mxu0 %v1124
  %1178 = vmatprep.subr.mxu0 %v1127
  %1179 = vmatpush1.msra.mxu0 %v1126
  %1180 = vmatprep.subr.mxu0 %v1129
  %1181 = vmatpush1.msra.mxu0 %v1128
  %1182 = vmatprep.subr.mxu0 %v1131
  %1183 = vmatpush1.msra.mxu0 %v1130
  %1184 = vmatprep.subr.mxu0 %v404
  %1185 = vmatpush1.msra.mxu0 %v404
  %1186 = vmatprep.subr.mxu0 0.0
  %1187 = vmatpush1.msra.mxu0 0.0
  %1188 = vmatprep.subr.mxu0 0.0
  %1189 = vmatpush1.msra.mxu0 0.0
  %1190 = vmatprep.subr.mxu0 0.0
  %1191 = vmatpush1.msra.mxu0 0.0
  %1192 = vmatprep.subr.mxu0 0.0
  %1193 = vmatpush1.msra.mxu0 0.0
  %1194 = vmatprep.subr.mxu0 0.0
  %1195 = vmatpush1.msra.mxu0 0.0
  %1196 = vmatprep.subr.mxu0 0.0
  %1197 = vmatpush1.msra.mxu0 0.0
  %1198 = vmatprep.subr.mxu0 0.0
  %1199 = vmatpush1.msra.mxu0 0.0
  %1200 = vmatprep.subr.mxu0 0.0
  %1201 = vmatpush1.msra.mxu0 0.0
  %1202 = vmatprep.subr.mxu0 0.0
  %1203 = vmatpush1.msra.mxu0 0.0
  %1204 = vmatprep.subr.mxu0 0.0
  %1205 = vmatpush1.msra.mxu0 0.0
  %1206 = vmatprep.subr.mxu0 0.0
  %1207 = vmatpush1.msra.mxu0 0.0
  %1208 = vmatprep.mubr.f32.mxu0 %v1133
  %1209 = vmatmul.mubr.f32.gmra.mrb[0].mxu0 %v996
  %v1210 = vpop.f32.mrb[0].mxu0
  %v1211 = vadd.f32 0.0, %v1210
  %v1212 = vpop.f32.mrb[0].mxu0
  %v1213 = vadd.f32 0.0, %v1212
  %1214 = vmatprep.mubr.f32.mxu0 %v1136
  %1215 = vmatmul.mubr.f32.gmra.mrb[0].mxu0 %v998
  %v1216 = vpop.f32.mrb[0].mxu0
  %v1217 = vadd.f32 0.0, %v1216
  %v1218 = vpop.f32.mrb[0].mxu0
  %v1219 = vadd.f32 0.0, %v1218
  %1220 = vmatprep.mubr.f32.mxu0 %v1139
  %1221 = vmatmul.mubr.f32.gmra.mrb[0].mxu0 %v1000
  %v1222 = vpop.f32.mrb[0].mxu0
  %v1223 = vadd.f32 0.0, %v1222
  %v1224 = vpop.f32.mrb[0].mxu0
  %v1225 = vadd.f32 0.0, %v1224
  %1226 = vmatprep.mubr.f32.mxu0 %v1142
  %1227 = vmatmul.mubr.f32.gmra.mrb[0].mxu0 %v1002
  %v1228 = vpop.f32.mrb[0].mxu0
  %v1229 = vadd.f32 0.0, %v1228
  %v1230 = vpop.f32.mrb[0].mxu0
  %v1231 = vadd.f32 0.0, %v1230
  %1232 = vdwg.mxu0
  %v1233 = vmax.f32 %v1211, 0.0
  %v1234 = vmax.f32 %v1213, 0.0
  %v1235 = vmax.f32 %v1217, 0.0
  %v1236 = vmax.f32 %v1219, 0.0
  %v1237 = vmax.f32 %v1223, 0.0
  %v1238 = vmax.f32 %v1225, 0.0
  %v1239 = vmax.f32 %v1229, 0.0
  %v1240 = vmax.f32 %v1231, 0.0
  %s1241 = scalar_lea.vmem %s3, 256
  %v1242 = vld [vmem:[%s1241] sm:$0xff]
  %v1243 = vld [vmem:[%s1241 + $0x8] sm:$0xff]
  %v1244 = vld [vmem:[%s1241 + $0x10] sm:$0xff]
  %v1245 = vld [vmem:[%s1241 + $0x18] sm:$0xff]
  %v1246 = vld [vmem:[%s1241 + $0x20] sm:$0xff]
  %v1247 = vld [vmem:[%s1241 + $0x28] sm:$0xff]
  %v1248 = vld [vmem:[%s1241 + $0x30] sm:$0xff]
  %v1249 = vld [vmem:[%s1241 + $0x38] sm:$0xff]
  %1250 = vrot.lane.b32.xlu0 %v1233, 2
  %v1251 = vpop.permute.xlu0 %1250
  %1252 = vrot.lane.b32.xlu0 %v1235, 2
  %v1253 = vpop.permute.xlu0 %1252
  %1254 = vrot.lane.b32.xlu0 %v1237, 2
  %v1255 = vpop.permute.xlu0 %1254
  %1256 = vrot.lane.b32.xlu0 %v1239, 2
  %v1257 = vpop.permute.xlu0 %1256
  %1258 = vrot.lane.b32.xlu0 %v1234, 2
  %v1259 = vpop.permute.xlu0 %1258
  %1260 = vrot.lane.b32.xlu0 %v1236, 2
  %v1261 = vpop.permute.xlu0 %1260
  %1262 = vrot.lane.b32.xlu0 %v1238, 2
  %v1263 = vpop.permute.xlu0 %1262
  %1264 = vrot.lane.b32.xlu0 %v1240, 2
  %v1265 = vpop.permute.xlu0 %1264
  %v1266 = vsel %vm41, %v1251, %v1259
  %v1267 = vsel %vm41, %v1253, %v1261
  %v1268 = vsel %vm41, %v1255, %v1263
  %v1269 = vsel %vm41, %v1257, %v1265
  %v1270 = vsel %vm41, %v1259, %v1251
  %v1271 = vsel %vm41, %v1261, %v1253
  %v1272 = vsel %vm41, %v1263, %v1255
  %v1273 = vsel %vm41, %v1265, %v1257
  %v1274 = vmul.f32 %v1270, %v48
  %v1275 = vmul.f32 %v1266, %v52
  %v1276 = vmul.f32 %v1271, %v48
  %v1277 = vmul.f32 %v1267, %v52
  %v1278 = vmul.f32 %v1272, %v48
  %v1279 = vmul.f32 %v1268, %v52
  %v1280 = vmul.f32 %v1273, %v48
  %v1281 = vmul.f32 %v1269, %v52
  %1282 = vrot.lane.b32.xlu0 %v1233, 1
  %v1283 = vpop.permute.xlu0 %1282
  %1284 = vrot.lane.b32.xlu0 %v1235, 1
  %v1285 = vpop.permute.xlu0 %1284
  %1286 = vrot.lane.b32.xlu0 %v1237, 1
  %v1287 = vpop.permute.xlu0 %1286
  %1288 = vrot.lane.b32.xlu0 %v1239, 1
  %v1289 = vpop.permute.xlu0 %1288
  %1290 = vrot.lane.b32.xlu0 %v1234, 1
  %v1291 = vpop.permute.xlu0 %1290
  %1292 = vrot.lane.b32.xlu0 %v1236, 1
  %v1293 = vpop.permute.xlu0 %1292
  %1294 = vrot.lane.b32.xlu0 %v1238, 1
  %v1295 = vpop.permute.xlu0 %1294
  %1296 = vrot.lane.b32.xlu0 %v1240, 1
  %v1297 = vpop.permute.xlu0 %1296
  %v1298 = vsel %vm61, %v1283, %v1291
  %v1299 = vsel %vm61, %v1285, %v1293
  %v1300 = vsel %vm61, %v1287, %v1295
  %v1301 = vsel %vm61, %v1289, %v1297
  %v1302 = vsel %vm61, %v1291, %v1283
  %v1303 = vsel %vm61, %v1293, %v1285
  %v1304 = vsel %vm61, %v1295, %v1287
  %v1305 = vsel %vm61, %v1297, %v1289
  %v1306 = vmul.f32 %v1302, %v68
  %v1307 = vmul.f32 %v1298, %v72
  %v1308 = vmul.f32 %v1303, %v68
  %v1309 = vmul.f32 %v1299, %v72
  %v1310 = vmul.f32 %v1304, %v68
  %v1311 = vmul.f32 %v1300, %v72
  %v1312 = vmul.f32 %v1305, %v68
  %v1313 = vmul.f32 %v1301, %v72
  %1314 = vrot.lane.b32.xlu0 %v1233, 127
  %v1315 = vpop.permute.xlu0 %1314
  %1316 = vrot.lane.b32.xlu0 %v1235, 127
  %v1317 = vpop.permute.xlu0 %1316
  %1318 = vrot.lane.b32.xlu0 %v1237, 127
  %v1319 = vpop.permute.xlu0 %1318
  %1320 = vrot.lane.b32.xlu0 %v1239, 127
  %v1321 = vpop.permute.xlu0 %1320
  %1322 = vrot.lane.b32.xlu0 %v1234, 127
  %v1323 = vpop.permute.xlu0 %1322
  %1324 = vrot.lane.b32.xlu0 %v1236, 127
  %v1325 = vpop.permute.xlu0 %1324
  %1326 = vrot.lane.b32.xlu0 %v1238, 127
  %v1327 = vpop.permute.xlu0 %1326
  %1328 = vrot.lane.b32.xlu0 %v1240, 127
  %v1329 = vpop.permute.xlu0 %1328
  %v1330 = vsel %vm81, %v1315, %v1323
  %v1331 = vsel %vm81, %v1317, %v1325
  %v1332 = vsel %vm81, %v1319, %v1327
  %v1333 = vsel %vm81, %v1321, %v1329
  %v1334 = vsel %vm81, %v1323, %v1315
  %v1335 = vsel %vm81, %v1325, %v1317
  %v1336 = vsel %vm81, %v1327, %v1319
  %v1337 = vsel %vm81, %v1329, %v1321
  %v1338 = vmul.f32 %v1330, %v88
  %v1339 = vmul.f32 %v1334, %v92
  %v1340 = vmul.f32 %v1331, %v88
  %v1341 = vmul.f32 %v1335, %v92
  %v1342 = vmul.f32 %v1332, %v88
  %v1343 = vmul.f32 %v1336, %v92
  %v1344 = vmul.f32 %v1333, %v88
  %v1345 = vmul.f32 %v1337, %v92
  %1346 = vrot.lane.b32.xlu0 %v1233, 126
  %v1347 = vpop.permute.xlu0 %1346
  %1348 = vrot.lane.b32.xlu0 %v1235, 126
  %v1349 = vpop.permute.xlu0 %1348
  %1350 = vrot.lane.b32.xlu0 %v1237, 126
  %v1351 = vpop.permute.xlu0 %1350
  %1352 = vrot.lane.b32.xlu0 %v1239, 126
  %v1353 = vpop.permute.xlu0 %1352
  %1354 = vrot.lane.b32.xlu0 %v1234, 126
  %v1355 = vpop.permute.xlu0 %1354
  %1356 = vrot.lane.b32.xlu0 %v1236, 126
  %v1357 = vpop.permute.xlu0 %1356
  %1358 = vrot.lane.b32.xlu0 %v1238, 126
  %v1359 = vpop.permute.xlu0 %1358
  %1360 = vrot.lane.b32.xlu0 %v1240, 126
  %v1361 = vpop.permute.xlu0 %1360
  %v1362 = vsel %vm101, %v1347, %v1355
  %v1363 = vsel %vm101, %v1349, %v1357
  %v1364 = vsel %vm101, %v1351, %v1359
  %v1365 = vsel %vm101, %v1353, %v1361
  %v1366 = vsel %vm101, %v1355, %v1347
  %v1367 = vsel %vm101, %v1357, %v1349
  %v1368 = vsel %vm101, %v1359, %v1351
  %v1369 = vsel %vm101, %v1361, %v1353
  %v1370 = vmul.f32 %v1362, %v108
  %v1371 = vmul.f32 %v1366, %v112
  %v1372 = vmul.f32 %v1363, %v108
  %v1373 = vmul.f32 %v1367, %v112
  %v1374 = vmul.f32 %v1364, %v108
  %v1375 = vmul.f32 %v1368, %v112
  %v1376 = vmul.f32 %v1365, %v108
  %v1377 = vmul.f32 %v1369, %v112
  %v1379 = vsel %vm389, %v1243, 0
  %v1382 = vsel %vm389, %v1245, 0
  %v1385 = vsel %vm389, %v1247, 0
  %v1388 = vsel %vm389, %v1249, 0
  %1390 = vmatprep.subr.mxu0 %v1275
  %1391 = vmatpush1.msra.mxu0 %v1274
  %1392 = vmatprep.subr.mxu0 %v1277
  %1393 = vmatpush1.msra.mxu0 %v1276
  %1394 = vmatprep.subr.mxu0 %v1279
  %1395 = vmatpush1.msra.mxu0 %v1278
  %1396 = vmatprep.subr.mxu0 %v1281
  %1397 = vmatpush1.msra.mxu0 %v1280
  %1398 = vmatprep.subr.mxu0 %v1307
  %1399 = vmatpush1.msra.mxu0 %v1306
  %1400 = vmatprep.subr.mxu0 %v1309
  %1401 = vmatpush1.msra.mxu0 %v1308
  %1402 = vmatprep.subr.mxu0 %v1311
  %1403 = vmatpush1.msra.mxu0 %v1310
  %1404 = vmatprep.subr.mxu0 %v1313
  %1405 = vmatpush1.msra.mxu0 %v1312
  %1406 = vmatprep.subr.mxu0 %v1234
  %1407 = vmatpush1.msra.mxu0 %v1233
  %1408 = vmatprep.subr.mxu0 %v1236
  %1409 = vmatpush1.msra.mxu0 %v1235
  %1410 = vmatprep.subr.mxu0 %v1238
  %1411 = vmatpush1.msra.mxu0 %v1237
  %1412 = vmatprep.subr.mxu0 %v1240
  %1413 = vmatpush1.msra.mxu0 %v1239
  %1414 = vmatprep.subr.mxu0 %v1339
  %1415 = vmatpush1.msra.mxu0 %v1338
  %1416 = vmatprep.subr.mxu0 %v1341
  %1417 = vmatpush1.msra.mxu0 %v1340
  %1418 = vmatprep.subr.mxu0 %v1343
  %1419 = vmatpush1.msra.mxu0 %v1342
  %1420 = vmatprep.subr.mxu0 %v1345
  %1421 = vmatpush1.msra.mxu0 %v1344
  %1422 = vmatprep.subr.mxu0 %v1371
  %1423 = vmatpush1.msra.mxu0 %v1370
  %1424 = vmatprep.subr.mxu0 %v1373
  %1425 = vmatpush1.msra.mxu0 %v1372
  %1426 = vmatprep.subr.mxu0 %v1375
  %1427 = vmatpush1.msra.mxu0 %v1374
  %1428 = vmatprep.subr.mxu0 %v1377
  %1429 = vmatpush1.msra.mxu0 %v1376
  %1430 = vmatprep.subr.mxu0 %v404
  %1431 = vmatpush1.msra.mxu0 %v404
  %1432 = vmatprep.subr.mxu0 0.0
  %1433 = vmatpush1.msra.mxu0 0.0
  %1434 = vmatprep.subr.mxu0 0.0
  %1435 = vmatpush1.msra.mxu0 0.0
  %1436 = vmatprep.subr.mxu0 0.0
  %1437 = vmatpush1.msra.mxu0 0.0
  %1438 = vmatprep.subr.mxu0 0.0
  %1439 = vmatpush1.msra.mxu0 0.0
  %1440 = vmatprep.subr.mxu0 0.0
  %1441 = vmatpush1.msra.mxu0 0.0
  %1442 = vmatprep.subr.mxu0 0.0
  %1443 = vmatpush1.msra.mxu0 0.0
  %1444 = vmatprep.subr.mxu0 0.0
  %1445 = vmatpush1.msra.mxu0 0.0
  %1446 = vmatprep.subr.mxu0 0.0
  %1447 = vmatpush1.msra.mxu0 0.0
  %1448 = vmatprep.subr.mxu0 0.0
  %1449 = vmatpush1.msra.mxu0 0.0
  %1450 = vmatprep.subr.mxu0 0.0
  %1451 = vmatpush1.msra.mxu0 0.0
  %1452 = vmatprep.subr.mxu0 0.0
  %1453 = vmatpush1.msra.mxu0 0.0
  %1454 = vmatprep.mubr.f32.mxu0 %v1379
  %1455 = vmatmul.mubr.f32.gmra.mrb[0].mxu0 %v1242
  %v1456 = vpop.f32.mrb[0].mxu0
  %v1457 = vadd.f32 0.0, %v1456
  %v1458 = vpop.f32.mrb[0].mxu0
  %v1459 = vadd.f32 0.0, %v1458
  %1460 = vmatprep.mubr.f32.mxu0 %v1382
  %1461 = vmatmul.mubr.f32.gmra.mrb[0].mxu0 %v1244
  %v1462 = vpop.f32.mrb[0].mxu0
  %v1463 = vadd.f32 0.0, %v1462
  %v1464 = vpop.f32.mrb[0].mxu0
  %v1465 = vadd.f32 0.0, %v1464
  %1466 = vmatprep.mubr.f32.mxu0 %v1385
  %1467 = vmatmul.mubr.f32.gmra.mrb[0].mxu0 %v1246
  %v1468 = vpop.f32.mrb[0].mxu0
  %v1469 = vadd.f32 0.0, %v1468
  %v1470 = vpop.f32.mrb[0].mxu0
  %v1471 = vadd.f32 0.0, %v1470
  %1472 = vmatprep.mubr.f32.mxu0 %v1388
  %1473 = vmatmul.mubr.f32.gmra.mrb[0].mxu0 %v1248
  %v1474 = vpop.f32.mrb[0].mxu0
  %v1475 = vadd.f32 0.0, %v1474
  %v1476 = vpop.f32.mrb[0].mxu0
  %v1477 = vadd.f32 0.0, %v1476
  %1478 = vdwg.mxu0
  %v1479 = vmax.f32 %v1457, 0.0
  %v1480 = vmax.f32 %v1459, 0.0
  %v1481 = vmax.f32 %v1463, 0.0
  %v1482 = vmax.f32 %v1465, 0.0
  %v1483 = vmax.f32 %v1469, 0.0
  %v1484 = vmax.f32 %v1471, 0.0
  %v1485 = vmax.f32 %v1475, 0.0
  %v1486 = vmax.f32 %v1477, 0.0
  %s1487 = scalar_lea.vmem %s3, 320
  %v1488 = vld [vmem:[%s1487] sm:$0xff]
  %v1489 = vld [vmem:[%s1487 + $0x8] sm:$0xff]
  %v1490 = vld [vmem:[%s1487 + $0x10] sm:$0xff]
  %v1491 = vld [vmem:[%s1487 + $0x18] sm:$0xff]
  %v1492 = vld [vmem:[%s1487 + $0x20] sm:$0xff]
  %v1493 = vld [vmem:[%s1487 + $0x28] sm:$0xff]
  %v1494 = vld [vmem:[%s1487 + $0x30] sm:$0xff]
  %v1495 = vld [vmem:[%s1487 + $0x38] sm:$0xff]
  %1496 = vrot.lane.b32.xlu0 %v1479, 2
  %v1497 = vpop.permute.xlu0 %1496
  %1498 = vrot.lane.b32.xlu0 %v1481, 2
  %v1499 = vpop.permute.xlu0 %1498
  %1500 = vrot.lane.b32.xlu0 %v1483, 2
  %v1501 = vpop.permute.xlu0 %1500
  %1502 = vrot.lane.b32.xlu0 %v1485, 2
  %v1503 = vpop.permute.xlu0 %1502
  %1504 = vrot.lane.b32.xlu0 %v1480, 2
  %v1505 = vpop.permute.xlu0 %1504
  %1506 = vrot.lane.b32.xlu0 %v1482, 2
  %v1507 = vpop.permute.xlu0 %1506
  %1508 = vrot.lane.b32.xlu0 %v1484, 2
  %v1509 = vpop.permute.xlu0 %1508
  %1510 = vrot.lane.b32.xlu0 %v1486, 2
  %v1511 = vpop.permute.xlu0 %1510
  %v1512 = vsel %vm41, %v1497, %v1505
  %v1513 = vsel %vm41, %v1499, %v1507
  %v1514 = vsel %vm41, %v1501, %v1509
  %v1515 = vsel %vm41, %v1503, %v1511
  %v1516 = vsel %vm41, %v1505, %v1497
  %v1517 = vsel %vm41, %v1507, %v1499
  %v1518 = vsel %vm41, %v1509, %v1501
  %v1519 = vsel %vm41, %v1511, %v1503
  %v1520 = vmul.f32 %v1516, %v48
  %v1521 = vmul.f32 %v1512, %v52
  %v1522 = vmul.f32 %v1517, %v48
  %v1523 = vmul.f32 %v1513, %v52
  %v1524 = vmul.f32 %v1518, %v48
  %v1525 = vmul.f32 %v1514, %v52
  %v1526 = vmul.f32 %v1519, %v48
  %v1527 = vmul.f32 %v1515, %v52
  %1528 = vrot.lane.b32.xlu0 %v1479, 1
  %v1529 = vpop.permute.xlu0 %1528
  %1530 = vrot.lane.b32.xlu0 %v1481, 1
  %v1531 = vpop.permute.xlu0 %1530
  %1532 = vrot.lane.b32.xlu0 %v1483, 1
  %v1533 = vpop.permute.xlu0 %1532
  %1534 = vrot.lane.b32.xlu0 %v1485, 1
  %v1535 = vpop.permute.xlu0 %1534
  %1536 = vrot.lane.b32.xlu0 %v1480, 1
  %v1537 = vpop.permute.xlu0 %1536
  %1538 = vrot.lane.b32.xlu0 %v1482, 1
  %v1539 = vpop.permute.xlu0 %1538
  %1540 = vrot.lane.b32.xlu0 %v1484, 1
  %v1541 = vpop.permute.xlu0 %1540
  %1542 = vrot.lane.b32.xlu0 %v1486, 1
  %v1543 = vpop.permute.xlu0 %1542
  %v1544 = vsel %vm61, %v1529, %v1537
  %v1545 = vsel %vm61, %v1531, %v1539
  %v1546 = vsel %vm61, %v1533, %v1541
  %v1547 = vsel %vm61, %v1535, %v1543
  %v1548 = vsel %vm61, %v1537, %v1529
  %v1549 = vsel %vm61, %v1539, %v1531
  %v1550 = vsel %vm61, %v1541, %v1533
  %v1551 = vsel %vm61, %v1543, %v1535
  %v1552 = vmul.f32 %v1548, %v68
  %v1553 = vmul.f32 %v1544, %v72
  %v1554 = vmul.f32 %v1549, %v68
  %v1555 = vmul.f32 %v1545, %v72
  %v1556 = vmul.f32 %v1550, %v68
  %v1557 = vmul.f32 %v1546, %v72
  %v1558 = vmul.f32 %v1551, %v68
  %v1559 = vmul.f32 %v1547, %v72
  %1560 = vrot.lane.b32.xlu0 %v1479, 127
  %v1561 = vpop.permute.xlu0 %1560
  %1562 = vrot.lane.b32.xlu0 %v1481, 127
  %v1563 = vpop.permute.xlu0 %1562
  %1564 = vrot.lane.b32.xlu0 %v1483, 127
  %v1565 = vpop.permute.xlu0 %1564
  %1566 = vrot.lane.b32.xlu0 %v1485, 127
  %v1567 = vpop.permute.xlu0 %1566
  %1568 = vrot.lane.b32.xlu0 %v1480, 127
  %v1569 = vpop.permute.xlu0 %1568
  %1570 = vrot.lane.b32.xlu0 %v1482, 127
  %v1571 = vpop.permute.xlu0 %1570
  %1572 = vrot.lane.b32.xlu0 %v1484, 127
  %v1573 = vpop.permute.xlu0 %1572
  %1574 = vrot.lane.b32.xlu0 %v1486, 127
  %v1575 = vpop.permute.xlu0 %1574
  %v1576 = vsel %vm81, %v1561, %v1569
  %v1577 = vsel %vm81, %v1563, %v1571
  %v1578 = vsel %vm81, %v1565, %v1573
  %v1579 = vsel %vm81, %v1567, %v1575
  %v1580 = vsel %vm81, %v1569, %v1561
  %v1581 = vsel %vm81, %v1571, %v1563
  %v1582 = vsel %vm81, %v1573, %v1565
  %v1583 = vsel %vm81, %v1575, %v1567
  %v1584 = vmul.f32 %v1576, %v88
  %v1585 = vmul.f32 %v1580, %v92
  %v1586 = vmul.f32 %v1577, %v88
  %v1587 = vmul.f32 %v1581, %v92
  %v1588 = vmul.f32 %v1578, %v88
  %v1589 = vmul.f32 %v1582, %v92
  %v1590 = vmul.f32 %v1579, %v88
  %v1591 = vmul.f32 %v1583, %v92
  %1592 = vrot.lane.b32.xlu0 %v1479, 126
  %v1593 = vpop.permute.xlu0 %1592
  %1594 = vrot.lane.b32.xlu0 %v1481, 126
  %v1595 = vpop.permute.xlu0 %1594
  %1596 = vrot.lane.b32.xlu0 %v1483, 126
  %v1597 = vpop.permute.xlu0 %1596
  %1598 = vrot.lane.b32.xlu0 %v1485, 126
  %v1599 = vpop.permute.xlu0 %1598
  %1600 = vrot.lane.b32.xlu0 %v1480, 126
  %v1601 = vpop.permute.xlu0 %1600
  %1602 = vrot.lane.b32.xlu0 %v1482, 126
  %v1603 = vpop.permute.xlu0 %1602
  %1604 = vrot.lane.b32.xlu0 %v1484, 126
  %v1605 = vpop.permute.xlu0 %1604
  %1606 = vrot.lane.b32.xlu0 %v1486, 126
  %v1607 = vpop.permute.xlu0 %1606
  %v1608 = vsel %vm101, %v1593, %v1601
  %v1609 = vsel %vm101, %v1595, %v1603
  %v1610 = vsel %vm101, %v1597, %v1605
  %v1611 = vsel %vm101, %v1599, %v1607
  %v1612 = vsel %vm101, %v1601, %v1593
  %v1613 = vsel %vm101, %v1603, %v1595
  %v1614 = vsel %vm101, %v1605, %v1597
  %v1615 = vsel %vm101, %v1607, %v1599
  %v1616 = vmul.f32 %v1608, %v108
  %v1617 = vmul.f32 %v1612, %v112
  %v1618 = vmul.f32 %v1609, %v108
  %v1619 = vmul.f32 %v1613, %v112
  %v1620 = vmul.f32 %v1610, %v108
  %v1621 = vmul.f32 %v1614, %v112
  %v1622 = vmul.f32 %v1611, %v108
  %v1623 = vmul.f32 %v1615, %v112
  %v1625 = vsel %vm389, %v1489, 0
  %v1628 = vsel %vm389, %v1491, 0
  %v1631 = vsel %vm389, %v1493, 0
  %v1634 = vsel %vm389, %v1495, 0
  %1636 = vmatprep.subr.mxu0 %v1521
  %1637 = vmatpush1.msra.mxu0 %v1520
  %1638 = vmatprep.subr.mxu0 %v1523
  %1639 = vmatpush1.msra.mxu0 %v1522
  %1640 = vmatprep.subr.mxu0 %v1525
  %1641 = vmatpush1.msra.mxu0 %v1524
  %1642 = vmatprep.subr.mxu0 %v1527
  %1643 = vmatpush1.msra.mxu0 %v1526
  %1644 = vmatprep.subr.mxu0 %v1553
  %1645 = vmatpush1.msra.mxu0 %v1552
  %1646 = vmatprep.subr.mxu0 %v1555
  %1647 = vmatpush1.msra.mxu0 %v1554
  %1648 = vmatprep.subr.mxu0 %v1557
  %1649 = vmatpush1.msra.mxu0 %v1556
  %1650 = vmatprep.subr.mxu0 %v1559
  %1651 = vmatpush1.msra.mxu0 %v1558
  %1652 = vmatprep.subr.mxu0 %v1480
  %1653 = vmatpush1.msra.mxu0 %v1479
  %1654 = vmatprep.subr.mxu0 %v1482
  %1655 = vmatpush1.msra.mxu0 %v1481
  %1656 = vmatprep.subr.mxu0 %v1484
  %1657 = vmatpush1.msra.mxu0 %v1483
  %1658 = vmatprep.subr.mxu0 %v1486
  %1659 = vmatpush1.msra.mxu0 %v1485
  %1660 = vmatprep.subr.mxu0 %v1585
  %1661 = vmatpush1.msra.mxu0 %v1584
  %1662 = vmatprep.subr.mxu0 %v1587
  %1663 = vmatpush1.msra.mxu0 %v1586
  %1664 = vmatprep.subr.mxu0 %v1589
  %1665 = vmatpush1.msra.mxu0 %v1588
  %1666 = vmatprep.subr.mxu0 %v1591
  %1667 = vmatpush1.msra.mxu0 %v1590
  %1668 = vmatprep.subr.mxu0 %v1617
  %1669 = vmatpush1.msra.mxu0 %v1616
  %1670 = vmatprep.subr.mxu0 %v1619
  %1671 = vmatpush1.msra.mxu0 %v1618
  %1672 = vmatprep.subr.mxu0 %v1621
  %1673 = vmatpush1.msra.mxu0 %v1620
  %1674 = vmatprep.subr.mxu0 %v1623
  %1675 = vmatpush1.msra.mxu0 %v1622
  %1676 = vmatprep.subr.mxu0 %v404
  %1677 = vmatpush1.msra.mxu0 %v404
  %1678 = vmatprep.subr.mxu0 0.0
  %1679 = vmatpush1.msra.mxu0 0.0
  %1680 = vmatprep.subr.mxu0 0.0
  %1681 = vmatpush1.msra.mxu0 0.0
  %1682 = vmatprep.subr.mxu0 0.0
  %1683 = vmatpush1.msra.mxu0 0.0
  %1684 = vmatprep.subr.mxu0 0.0
  %1685 = vmatpush1.msra.mxu0 0.0
  %1686 = vmatprep.subr.mxu0 0.0
  %1687 = vmatpush1.msra.mxu0 0.0
  %1688 = vmatprep.subr.mxu0 0.0
  %1689 = vmatpush1.msra.mxu0 0.0
  %1690 = vmatprep.subr.mxu0 0.0
  %1691 = vmatpush1.msra.mxu0 0.0
  %1692 = vmatprep.subr.mxu0 0.0
  %1693 = vmatpush1.msra.mxu0 0.0
  %1694 = vmatprep.subr.mxu0 0.0
  %1695 = vmatpush1.msra.mxu0 0.0
  %1696 = vmatprep.subr.mxu0 0.0
  %1697 = vmatpush1.msra.mxu0 0.0
  %1698 = vmatprep.subr.mxu0 0.0
  %1699 = vmatpush1.msra.mxu0 0.0
  %1700 = vmatprep.mubr.f32.mxu0 %v1625
  %1701 = vmatmul.mubr.f32.gmra.mrb[0].mxu0 %v1488
  %v1702 = vpop.f32.mrb[0].mxu0
  %v1703 = vadd.f32 0.0, %v1702
  %v1704 = vpop.f32.mrb[0].mxu0
  %v1705 = vadd.f32 0.0, %v1704
  %1706 = vmatprep.mubr.f32.mxu0 %v1628
  %1707 = vmatmul.mubr.f32.gmra.mrb[0].mxu0 %v1490
  %v1708 = vpop.f32.mrb[0].mxu0
  %v1709 = vadd.f32 0.0, %v1708
  %v1710 = vpop.f32.mrb[0].mxu0
  %v1711 = vadd.f32 0.0, %v1710
  %1712 = vmatprep.mubr.f32.mxu0 %v1631
  %1713 = vmatmul.mubr.f32.gmra.mrb[0].mxu0 %v1492
  %v1714 = vpop.f32.mrb[0].mxu0
  %v1715 = vadd.f32 0.0, %v1714
  %v1716 = vpop.f32.mrb[0].mxu0
  %v1717 = vadd.f32 0.0, %v1716
  %1718 = vmatprep.mubr.f32.mxu0 %v1634
  %1719 = vmatmul.mubr.f32.gmra.mrb[0].mxu0 %v1494
  %v1720 = vpop.f32.mrb[0].mxu0
  %v1721 = vadd.f32 0.0, %v1720
  %v1722 = vpop.f32.mrb[0].mxu0
  %v1723 = vadd.f32 0.0, %v1722
  %1724 = vdwg.mxu0
  %v1725 = vmax.f32 %v1703, 0.0
  %v1726 = vmax.f32 %v1705, 0.0
  %v1727 = vmax.f32 %v1709, 0.0
  %v1728 = vmax.f32 %v1711, 0.0
  %v1729 = vmax.f32 %v1715, 0.0
  %v1730 = vmax.f32 %v1717, 0.0
  %v1731 = vmax.f32 %v1721, 0.0
  %v1732 = vmax.f32 %v1723, 0.0
  %s1733 = scalar_lea.vmem %s3, 384
  %v1734 = vld [vmem:[%s1733] sm:$0xff]
  %v1735 = vld [vmem:[%s1733 + $0x8] sm:$0xff]
  %v1736 = vld [vmem:[%s1733 + $0x10] sm:$0xff]
  %v1737 = vld [vmem:[%s1733 + $0x18] sm:$0xff]
  %v1738 = vld [vmem:[%s1733 + $0x20] sm:$0xff]
  %v1739 = vld [vmem:[%s1733 + $0x28] sm:$0xff]
  %v1740 = vld [vmem:[%s1733 + $0x30] sm:$0xff]
  %v1741 = vld [vmem:[%s1733 + $0x38] sm:$0xff]
  %1742 = vrot.lane.b32.xlu0 %v1725, 2
  %v1743 = vpop.permute.xlu0 %1742
  %1744 = vrot.lane.b32.xlu0 %v1727, 2
  %v1745 = vpop.permute.xlu0 %1744
  %1746 = vrot.lane.b32.xlu0 %v1729, 2
  %v1747 = vpop.permute.xlu0 %1746
  %1748 = vrot.lane.b32.xlu0 %v1731, 2
  %v1749 = vpop.permute.xlu0 %1748
  %1750 = vrot.lane.b32.xlu0 %v1726, 2
  %v1751 = vpop.permute.xlu0 %1750
  %1752 = vrot.lane.b32.xlu0 %v1728, 2
  %v1753 = vpop.permute.xlu0 %1752
  %1754 = vrot.lane.b32.xlu0 %v1730, 2
  %v1755 = vpop.permute.xlu0 %1754
  %1756 = vrot.lane.b32.xlu0 %v1732, 2
  %v1757 = vpop.permute.xlu0 %1756
  %v1758 = vsel %vm41, %v1743, %v1751
  %v1759 = vsel %vm41, %v1745, %v1753
  %v1760 = vsel %vm41, %v1747, %v1755
  %v1761 = vsel %vm41, %v1749, %v1757
  %v1762 = vsel %vm41, %v1751, %v1743
  %v1763 = vsel %vm41, %v1753, %v1745
  %v1764 = vsel %vm41, %v1755, %v1747
  %v1765 = vsel %vm41, %v1757, %v1749
  %v1766 = vmul.f32 %v1762, %v48
  %v1767 = vmul.f32 %v1758, %v52
  %v1768 = vmul.f32 %v1763, %v48
  %v1769 = vmul.f32 %v1759, %v52
  %v1770 = vmul.f32 %v1764, %v48
  %v1771 = vmul.f32 %v1760, %v52
  %v1772 = vmul.f32 %v1765, %v48
  %v1773 = vmul.f32 %v1761, %v52
  %1774 = vrot.lane.b32.xlu0 %v1725, 1
  %v1775 = vpop.permute.xlu0 %1774
  %1776 = vrot.lane.b32.xlu0 %v1727, 1
  %v1777 = vpop.permute.xlu0 %1776
  %1778 = vrot.lane.b32.xlu0 %v1729, 1
  %v1779 = vpop.permute.xlu0 %1778
  %1780 = vrot.lane.b32.xlu0 %v1731, 1
  %v1781 = vpop.permute.xlu0 %1780
  %1782 = vrot.lane.b32.xlu0 %v1726, 1
  %v1783 = vpop.permute.xlu0 %1782
  %1784 = vrot.lane.b32.xlu0 %v1728, 1
  %v1785 = vpop.permute.xlu0 %1784
  %1786 = vrot.lane.b32.xlu0 %v1730, 1
  %v1787 = vpop.permute.xlu0 %1786
  %1788 = vrot.lane.b32.xlu0 %v1732, 1
  %v1789 = vpop.permute.xlu0 %1788
  %v1790 = vsel %vm61, %v1775, %v1783
  %v1791 = vsel %vm61, %v1777, %v1785
  %v1792 = vsel %vm61, %v1779, %v1787
  %v1793 = vsel %vm61, %v1781, %v1789
  %v1794 = vsel %vm61, %v1783, %v1775
  %v1795 = vsel %vm61, %v1785, %v1777
  %v1796 = vsel %vm61, %v1787, %v1779
  %v1797 = vsel %vm61, %v1789, %v1781
  %v1798 = vmul.f32 %v1794, %v68
  %v1799 = vmul.f32 %v1790, %v72
  %v1800 = vmul.f32 %v1795, %v68
  %v1801 = vmul.f32 %v1791, %v72
  %v1802 = vmul.f32 %v1796, %v68
  %v1803 = vmul.f32 %v1792, %v72
  %v1804 = vmul.f32 %v1797, %v68
  %v1805 = vmul.f32 %v1793, %v72
  %1806 = vrot.lane.b32.xlu0 %v1725, 127
  %v1807 = vpop.permute.xlu0 %1806
  %1808 = vrot.lane.b32.xlu0 %v1727, 127
  %v1809 = vpop.permute.xlu0 %1808
  %1810 = vrot.lane.b32.xlu0 %v1729, 127
  %v1811 = vpop.permute.xlu0 %1810
  %1812 = vrot.lane.b32.xlu0 %v1731, 127
  %v1813 = vpop.permute.xlu0 %1812
  %1814 = vrot.lane.b32.xlu0 %v1726, 127
  %v1815 = vpop.permute.xlu0 %1814
  %1816 = vrot.lane.b32.xlu0 %v1728, 127
  %v1817 = vpop.permute.xlu0 %1816
  %1818 = vrot.lane.b32.xlu0 %v1730, 127
  %v1819 = vpop.permute.xlu0 %1818
  %1820 = vrot.lane.b32.xlu0 %v1732, 127
  %v1821 = vpop.permute.xlu0 %1820
  %v1822 = vsel %vm81, %v1807, %v1815
  %v1823 = vsel %vm81, %v1809, %v1817
  %v1824 = vsel %vm81, %v1811, %v1819
  %v1825 = vsel %vm81, %v1813, %v1821
  %v1826 = vsel %vm81, %v1815, %v1807
  %v1827 = vsel %vm81, %v1817, %v1809
  %v1828 = vsel %vm81, %v1819, %v1811
  %v1829 = vsel %vm81, %v1821, %v1813
  %v1830 = vmul.f32 %v1822, %v88
  %v1831 = vmul.f32 %v1826, %v92
  %v1832 = vmul.f32 %v1823, %v88
  %v1833 = vmul.f32 %v1827, %v92
  %v1834 = vmul.f32 %v1824, %v88
  %v1835 = vmul.f32 %v1828, %v92
  %v1836 = vmul.f32 %v1825, %v88
  %v1837 = vmul.f32 %v1829, %v92
  %1838 = vrot.lane.b32.xlu0 %v1725, 126
  %v1839 = vpop.permute.xlu0 %1838
  %1840 = vrot.lane.b32.xlu0 %v1727, 126
  %v1841 = vpop.permute.xlu0 %1840
  %1842 = vrot.lane.b32.xlu0 %v1729, 126
  %v1843 = vpop.permute.xlu0 %1842
  %1844 = vrot.lane.b32.xlu0 %v1731, 126
  %v1845 = vpop.permute.xlu0 %1844
  %1846 = vrot.lane.b32.xlu0 %v1726, 126
  %v1847 = vpop.permute.xlu0 %1846
  %1848 = vrot.lane.b32.xlu0 %v1728, 126
  %v1849 = vpop.permute.xlu0 %1848
  %1850 = vrot.lane.b32.xlu0 %v1730, 126
  %v1851 = vpop.permute.xlu0 %1850
  %1852 = vrot.lane.b32.xlu0 %v1732, 126
  %v1853 = vpop.permute.xlu0 %1852
  %v1854 = vsel %vm101, %v1839, %v1847
  %v1855 = vsel %vm101, %v1841, %v1849
  %v1856 = vsel %vm101, %v1843, %v1851
  %v1857 = vsel %vm101, %v1845, %v1853
  %v1858 = vsel %vm101, %v1847, %v1839
  %v1859 = vsel %vm101, %v1849, %v1841
  %v1860 = vsel %vm101, %v1851, %v1843
  %v1861 = vsel %vm101, %v1853, %v1845
  %v1862 = vmul.f32 %v1854, %v108
  %v1863 = vmul.f32 %v1858, %v112
  %v1864 = vmul.f32 %v1855, %v108
  %v1865 = vmul.f32 %v1859, %v112
  %v1866 = vmul.f32 %v1856, %v108
  %v1867 = vmul.f32 %v1860, %v112
  %v1868 = vmul.f32 %v1857, %v108
  %v1869 = vmul.f32 %v1861, %v112
  %v1871 = vsel %vm389, %v1735, 0
  %v1874 = vsel %vm389, %v1737, 0
  %v1877 = vsel %vm389, %v1739, 0
  %v1880 = vsel %vm389, %v1741, 0
  %1882 = vmatprep.subr.mxu0 %v1767
  %1883 = vmatpush1.msra.mxu0 %v1766
  %1884 = vmatprep.subr.mxu0 %v1769
  %1885 = vmatpush1.msra.mxu0 %v1768
  %1886 = vmatprep.subr.mxu0 %v1771
  %1887 = vmatpush1.msra.mxu0 %v1770
  %1888 = vmatprep.subr.mxu0 %v1773
  %1889 = vmatpush1.msra.mxu0 %v1772
  %1890 = vmatprep.subr.mxu0 %v1799
  %1891 = vmatpush1.msra.mxu0 %v1798
  %1892 = vmatprep.subr.mxu0 %v1801
  %1893 = vmatpush1.msra.mxu0 %v1800
  %1894 = vmatprep.subr.mxu0 %v1803
  %1895 = vmatpush1.msra.mxu0 %v1802
  %1896 = vmatprep.subr.mxu0 %v1805
  %1897 = vmatpush1.msra.mxu0 %v1804
  %1898 = vmatprep.subr.mxu0 %v1726
  %1899 = vmatpush1.msra.mxu0 %v1725
  %1900 = vmatprep.subr.mxu0 %v1728
  %1901 = vmatpush1.msra.mxu0 %v1727
  %1902 = vmatprep.subr.mxu0 %v1730
  %1903 = vmatpush1.msra.mxu0 %v1729
  %1904 = vmatprep.subr.mxu0 %v1732
  %1905 = vmatpush1.msra.mxu0 %v1731
  %1906 = vmatprep.subr.mxu0 %v1831
  %1907 = vmatpush1.msra.mxu0 %v1830
  %1908 = vmatprep.subr.mxu0 %v1833
  %1909 = vmatpush1.msra.mxu0 %v1832
  %1910 = vmatprep.subr.mxu0 %v1835
  %1911 = vmatpush1.msra.mxu0 %v1834
  %1912 = vmatprep.subr.mxu0 %v1837
  %1913 = vmatpush1.msra.mxu0 %v1836
  %1914 = vmatprep.subr.mxu0 %v1863
  %1915 = vmatpush1.msra.mxu0 %v1862
  %1916 = vmatprep.subr.mxu0 %v1865
  %1917 = vmatpush1.msra.mxu0 %v1864
  %1918 = vmatprep.subr.mxu0 %v1867
  %1919 = vmatpush1.msra.mxu0 %v1866
  %1920 = vmatprep.subr.mxu0 %v1869
  %1921 = vmatpush1.msra.mxu0 %v1868
  %1922 = vmatprep.subr.mxu0 %v404
  %1923 = vmatpush1.msra.mxu0 %v404
  %1924 = vmatprep.subr.mxu0 0.0
  %1925 = vmatpush1.msra.mxu0 0.0
  %1926 = vmatprep.subr.mxu0 0.0
  %1927 = vmatpush1.msra.mxu0 0.0
  %1928 = vmatprep.subr.mxu0 0.0
  %1929 = vmatpush1.msra.mxu0 0.0
  %1930 = vmatprep.subr.mxu0 0.0
  %1931 = vmatpush1.msra.mxu0 0.0
  %1932 = vmatprep.subr.mxu0 0.0
  %1933 = vmatpush1.msra.mxu0 0.0
  %1934 = vmatprep.subr.mxu0 0.0
  %1935 = vmatpush1.msra.mxu0 0.0
  %1936 = vmatprep.subr.mxu0 0.0
  %1937 = vmatpush1.msra.mxu0 0.0
  %1938 = vmatprep.subr.mxu0 0.0
  %1939 = vmatpush1.msra.mxu0 0.0
  %1940 = vmatprep.subr.mxu0 0.0
  %1941 = vmatpush1.msra.mxu0 0.0
  %1942 = vmatprep.subr.mxu0 0.0
  %1943 = vmatpush1.msra.mxu0 0.0
  %1944 = vmatprep.subr.mxu0 0.0
  %1945 = vmatpush1.msra.mxu0 0.0
  %1946 = vmatprep.mubr.f32.mxu0 %v1871
  %1947 = vmatmul.mubr.f32.gmra.mrb[0].mxu0 %v1734
  %v1948 = vpop.f32.mrb[0].mxu0
  %v1949 = vadd.f32 0.0, %v1948
  %v1950 = vpop.f32.mrb[0].mxu0
  %v1951 = vadd.f32 0.0, %v1950
  %1952 = vmatprep.mubr.f32.mxu0 %v1874
  %1953 = vmatmul.mubr.f32.gmra.mrb[0].mxu0 %v1736
  %v1954 = vpop.f32.mrb[0].mxu0
  %v1955 = vadd.f32 0.0, %v1954
  %v1956 = vpop.f32.mrb[0].mxu0
  %v1957 = vadd.f32 0.0, %v1956
  %1958 = vmatprep.mubr.f32.mxu0 %v1877
  %1959 = vmatmul.mubr.f32.gmra.mrb[0].mxu0 %v1738
  %v1960 = vpop.f32.mrb[0].mxu0
  %v1961 = vadd.f32 0.0, %v1960
  %v1962 = vpop.f32.mrb[0].mxu0
  %v1963 = vadd.f32 0.0, %v1962
  %1964 = vmatprep.mubr.f32.mxu0 %v1880
  %1965 = vmatmul.mubr.f32.gmra.mrb[0].mxu0 %v1740
  %v1966 = vpop.f32.mrb[0].mxu0
  %v1967 = vadd.f32 0.0, %v1966
  %v1968 = vpop.f32.mrb[0].mxu0
  %v1969 = vadd.f32 0.0, %v1968
  %1970 = vdwg.mxu0
  %v1971 = vmax.f32 %v1949, 0.0
  %v1972 = vmax.f32 %v1951, 0.0
  %v1973 = vmax.f32 %v1955, 0.0
  %v1974 = vmax.f32 %v1957, 0.0
  %v1975 = vmax.f32 %v1961, 0.0
  %v1976 = vmax.f32 %v1963, 0.0
  %v1977 = vmax.f32 %v1967, 0.0
  %v1978 = vmax.f32 %v1969, 0.0
  %s1979 = scalar_lea.vmem %s3, 448
  %v1980 = vld [vmem:[%s1979] sm:$0xff]
  %v1981 = vld [vmem:[%s1979 + $0x8] sm:$0xff]
  %v1982 = vld [vmem:[%s1979 + $0x10] sm:$0xff]
  %v1983 = vld [vmem:[%s1979 + $0x18] sm:$0xff]
  %v1984 = vld [vmem:[%s1979 + $0x20] sm:$0xff]
  %v1985 = vld [vmem:[%s1979 + $0x28] sm:$0xff]
  %v1986 = vld [vmem:[%s1979 + $0x30] sm:$0xff]
  %v1987 = vld [vmem:[%s1979 + $0x38] sm:$0xff]
  %1988 = vrot.lane.b32.xlu0 %v1971, 2
  %v1989 = vpop.permute.xlu0 %1988
  %1990 = vrot.lane.b32.xlu0 %v1973, 2
  %v1991 = vpop.permute.xlu0 %1990
  %1992 = vrot.lane.b32.xlu0 %v1975, 2
  %v1993 = vpop.permute.xlu0 %1992
  %1994 = vrot.lane.b32.xlu0 %v1977, 2
  %v1995 = vpop.permute.xlu0 %1994
  %1996 = vrot.lane.b32.xlu0 %v1972, 2
  %v1997 = vpop.permute.xlu0 %1996
  %1998 = vrot.lane.b32.xlu0 %v1974, 2
  %v1999 = vpop.permute.xlu0 %1998
  %2000 = vrot.lane.b32.xlu0 %v1976, 2
  %v2001 = vpop.permute.xlu0 %2000
  %2002 = vrot.lane.b32.xlu0 %v1978, 2
  %v2003 = vpop.permute.xlu0 %2002
  %v2004 = vsel %vm41, %v1989, %v1997
  %v2005 = vsel %vm41, %v1991, %v1999
  %v2006 = vsel %vm41, %v1993, %v2001
  %v2007 = vsel %vm41, %v1995, %v2003
  %v2008 = vsel %vm41, %v1997, %v1989
  %v2009 = vsel %vm41, %v1999, %v1991
  %v2010 = vsel %vm41, %v2001, %v1993
  %v2011 = vsel %vm41, %v2003, %v1995
  %v2012 = vmul.f32 %v2008, %v48
  %v2013 = vmul.f32 %v2004, %v52
  %v2014 = vmul.f32 %v2009, %v48
  %v2015 = vmul.f32 %v2005, %v52
  %v2016 = vmul.f32 %v2010, %v48
  %v2017 = vmul.f32 %v2006, %v52
  %v2018 = vmul.f32 %v2011, %v48
  %v2019 = vmul.f32 %v2007, %v52
  %2020 = vrot.lane.b32.xlu0 %v1971, 1
  %v2021 = vpop.permute.xlu0 %2020
  %2022 = vrot.lane.b32.xlu0 %v1973, 1
  %v2023 = vpop.permute.xlu0 %2022
  %2024 = vrot.lane.b32.xlu0 %v1975, 1
  %v2025 = vpop.permute.xlu0 %2024
  %2026 = vrot.lane.b32.xlu0 %v1977, 1
  %v2027 = vpop.permute.xlu0 %2026
  %2028 = vrot.lane.b32.xlu0 %v1972, 1
  %v2029 = vpop.permute.xlu0 %2028
  %2030 = vrot.lane.b32.xlu0 %v1974, 1
  %v2031 = vpop.permute.xlu0 %2030
  %2032 = vrot.lane.b32.xlu0 %v1976, 1
  %v2033 = vpop.permute.xlu0 %2032
  %2034 = vrot.lane.b32.xlu0 %v1978, 1
  %v2035 = vpop.permute.xlu0 %2034
  %v2036 = vsel %vm61, %v2021, %v2029
  %v2037 = vsel %vm61, %v2023, %v2031
  %v2038 = vsel %vm61, %v2025, %v2033
  %v2039 = vsel %vm61, %v2027, %v2035
  %v2040 = vsel %vm61, %v2029, %v2021
  %v2041 = vsel %vm61, %v2031, %v2023
  %v2042 = vsel %vm61, %v2033, %v2025
  %v2043 = vsel %vm61, %v2035, %v2027
  %v2044 = vmul.f32 %v2040, %v68
  %v2045 = vmul.f32 %v2036, %v72
  %v2046 = vmul.f32 %v2041, %v68
  %v2047 = vmul.f32 %v2037, %v72
  %v2048 = vmul.f32 %v2042, %v68
  %v2049 = vmul.f32 %v2038, %v72
  %v2050 = vmul.f32 %v2043, %v68
  %v2051 = vmul.f32 %v2039, %v72
  %2052 = vrot.lane.b32.xlu0 %v1971, 127
  %v2053 = vpop.permute.xlu0 %2052
  %2054 = vrot.lane.b32.xlu0 %v1973, 127
  %v2055 = vpop.permute.xlu0 %2054
  %2056 = vrot.lane.b32.xlu0 %v1975, 127
  %v2057 = vpop.permute.xlu0 %2056
  %2058 = vrot.lane.b32.xlu0 %v1977, 127
  %v2059 = vpop.permute.xlu0 %2058
  %2060 = vrot.lane.b32.xlu0 %v1972, 127
  %v2061 = vpop.permute.xlu0 %2060
  %2062 = vrot.lane.b32.xlu0 %v1974, 127
  %v2063 = vpop.permute.xlu0 %2062
  %2064 = vrot.lane.b32.xlu0 %v1976, 127
  %v2065 = vpop.permute.xlu0 %2064
  %2066 = vrot.lane.b32.xlu0 %v1978, 127
  %v2067 = vpop.permute.xlu0 %2066
  %v2068 = vsel %vm81, %v2053, %v2061
  %v2069 = vsel %vm81, %v2055, %v2063
  %v2070 = vsel %vm81, %v2057, %v2065
  %v2071 = vsel %vm81, %v2059, %v2067
  %v2072 = vsel %vm81, %v2061, %v2053
  %v2073 = vsel %vm81, %v2063, %v2055
  %v2074 = vsel %vm81, %v2065, %v2057
  %v2075 = vsel %vm81, %v2067, %v2059
  %v2076 = vmul.f32 %v2068, %v88
  %v2077 = vmul.f32 %v2072, %v92
  %v2078 = vmul.f32 %v2069, %v88
  %v2079 = vmul.f32 %v2073, %v92
  %v2080 = vmul.f32 %v2070, %v88
  %v2081 = vmul.f32 %v2074, %v92
  %v2082 = vmul.f32 %v2071, %v88
  %v2083 = vmul.f32 %v2075, %v92
  %2084 = vrot.lane.b32.xlu0 %v1971, 126
  %v2085 = vpop.permute.xlu0 %2084
  %2086 = vrot.lane.b32.xlu0 %v1973, 126
  %v2087 = vpop.permute.xlu0 %2086
  %2088 = vrot.lane.b32.xlu0 %v1975, 126
  %v2089 = vpop.permute.xlu0 %2088
  %2090 = vrot.lane.b32.xlu0 %v1977, 126
  %v2091 = vpop.permute.xlu0 %2090
  %2092 = vrot.lane.b32.xlu0 %v1972, 126
  %v2093 = vpop.permute.xlu0 %2092
  %2094 = vrot.lane.b32.xlu0 %v1974, 126
  %v2095 = vpop.permute.xlu0 %2094
  %2096 = vrot.lane.b32.xlu0 %v1976, 126
  %v2097 = vpop.permute.xlu0 %2096
  %2098 = vrot.lane.b32.xlu0 %v1978, 126
  %v2099 = vpop.permute.xlu0 %2098
  %v2100 = vsel %vm101, %v2085, %v2093
  %v2101 = vsel %vm101, %v2087, %v2095
  %v2102 = vsel %vm101, %v2089, %v2097
  %v2103 = vsel %vm101, %v2091, %v2099
  %v2104 = vsel %vm101, %v2093, %v2085
  %v2105 = vsel %vm101, %v2095, %v2087
  %v2106 = vsel %vm101, %v2097, %v2089
  %v2107 = vsel %vm101, %v2099, %v2091
  %v2108 = vmul.f32 %v2100, %v108
  %v2109 = vmul.f32 %v2104, %v112
  %v2110 = vmul.f32 %v2101, %v108
  %v2111 = vmul.f32 %v2105, %v112
  %v2112 = vmul.f32 %v2102, %v108
  %v2113 = vmul.f32 %v2106, %v112
  %v2114 = vmul.f32 %v2103, %v108
  %v2115 = vmul.f32 %v2107, %v112
  %v2117 = vsel %vm389, %v1981, 0
  %v2120 = vsel %vm389, %v1983, 0
  %v2123 = vsel %vm389, %v1985, 0
  %v2126 = vsel %vm389, %v1987, 0
  %2128 = vmatprep.subr.mxu0 %v2013
  %2129 = vmatpush1.msra.mxu0 %v2012
  %2130 = vmatprep.subr.mxu0 %v2015
  %2131 = vmatpush1.msra.mxu0 %v2014
  %2132 = vmatprep.subr.mxu0 %v2017
  %2133 = vmatpush1.msra.mxu0 %v2016
  %2134 = vmatprep.subr.mxu0 %v2019
  %2135 = vmatpush1.msra.mxu0 %v2018
  %2136 = vmatprep.subr.mxu0 %v2045
  %2137 = vmatpush1.msra.mxu0 %v2044
  %2138 = vmatprep.subr.mxu0 %v2047
  %2139 = vmatpush1.msra.mxu0 %v2046
  %2140 = vmatprep.subr.mxu0 %v2049
  %2141 = vmatpush1.msra.mxu0 %v2048
  %2142 = vmatprep.subr.mxu0 %v2051
  %2143 = vmatpush1.msra.mxu0 %v2050
  %2144 = vmatprep.subr.mxu0 %v1972
  %2145 = vmatpush1.msra.mxu0 %v1971
  %2146 = vmatprep.subr.mxu0 %v1974
  %2147 = vmatpush1.msra.mxu0 %v1973
  %2148 = vmatprep.subr.mxu0 %v1976
  %2149 = vmatpush1.msra.mxu0 %v1975
  %2150 = vmatprep.subr.mxu0 %v1978
  %2151 = vmatpush1.msra.mxu0 %v1977
  %2152 = vmatprep.subr.mxu0 %v2077
  %2153 = vmatpush1.msra.mxu0 %v2076
  %2154 = vmatprep.subr.mxu0 %v2079
  %2155 = vmatpush1.msra.mxu0 %v2078
  %2156 = vmatprep.subr.mxu0 %v2081
  %2157 = vmatpush1.msra.mxu0 %v2080
  %2158 = vmatprep.subr.mxu0 %v2083
  %2159 = vmatpush1.msra.mxu0 %v2082
  %2160 = vmatprep.subr.mxu0 %v2109
  %2161 = vmatpush1.msra.mxu0 %v2108
  %2162 = vmatprep.subr.mxu0 %v2111
  %2163 = vmatpush1.msra.mxu0 %v2110
  %2164 = vmatprep.subr.mxu0 %v2113
  %2165 = vmatpush1.msra.mxu0 %v2112
  %2166 = vmatprep.subr.mxu0 %v2115
  %2167 = vmatpush1.msra.mxu0 %v2114
  %2168 = vmatprep.subr.mxu0 %v404
  %2169 = vmatpush1.msra.mxu0 %v404
  %2170 = vmatprep.subr.mxu0 0.0
  %2171 = vmatpush1.msra.mxu0 0.0
  %2172 = vmatprep.subr.mxu0 0.0
  %2173 = vmatpush1.msra.mxu0 0.0
  %2174 = vmatprep.subr.mxu0 0.0
  %2175 = vmatpush1.msra.mxu0 0.0
  %2176 = vmatprep.subr.mxu0 0.0
  %2177 = vmatpush1.msra.mxu0 0.0
  %2178 = vmatprep.subr.mxu0 0.0
  %2179 = vmatpush1.msra.mxu0 0.0
  %2180 = vmatprep.subr.mxu0 0.0
  %2181 = vmatpush1.msra.mxu0 0.0
  %2182 = vmatprep.subr.mxu0 0.0
  %2183 = vmatpush1.msra.mxu0 0.0
  %2184 = vmatprep.subr.mxu0 0.0
  %2185 = vmatpush1.msra.mxu0 0.0
  %2186 = vmatprep.subr.mxu0 0.0
  %2187 = vmatpush1.msra.mxu0 0.0
  %2188 = vmatprep.subr.mxu0 0.0
  %2189 = vmatpush1.msra.mxu0 0.0
  %2190 = vmatprep.subr.mxu0 0.0
  %2191 = vmatpush1.msra.mxu0 0.0
  %2192 = vmatprep.mubr.f32.mxu0 %v2117
  %2193 = vmatmul.mubr.f32.gmra.mrb[0].mxu0 %v1980
  %v2194 = vpop.f32.mrb[0].mxu0
  %v2195 = vadd.f32 0.0, %v2194
  %v2196 = vpop.f32.mrb[0].mxu0
  %v2197 = vadd.f32 0.0, %v2196
  %2198 = vmatprep.mubr.f32.mxu0 %v2120
  %2199 = vmatmul.mubr.f32.gmra.mrb[0].mxu0 %v1982
  %v2200 = vpop.f32.mrb[0].mxu0
  %v2201 = vadd.f32 0.0, %v2200
  %v2202 = vpop.f32.mrb[0].mxu0
  %v2203 = vadd.f32 0.0, %v2202
  %2204 = vmatprep.mubr.f32.mxu0 %v2123
  %2205 = vmatmul.mubr.f32.gmra.mrb[0].mxu0 %v1984
  %v2206 = vpop.f32.mrb[0].mxu0
  %v2207 = vadd.f32 0.0, %v2206
  %v2208 = vpop.f32.mrb[0].mxu0
  %v2209 = vadd.f32 0.0, %v2208
  %2210 = vmatprep.mubr.f32.mxu0 %v2126
  %2211 = vmatmul.mubr.f32.gmra.mrb[0].mxu0 %v1986
  %v2212 = vpop.f32.mrb[0].mxu0
  %v2213 = vadd.f32 0.0, %v2212
  %v2214 = vpop.f32.mrb[0].mxu0
  %v2215 = vadd.f32 0.0, %v2214
  %2216 = vdwg.mxu0
  %v2217 = vmax.f32 %v2195, 0.0
  %v2218 = vmax.f32 %v2197, 0.0
  %v2219 = vmax.f32 %v2201, 0.0
  %v2220 = vmax.f32 %v2203, 0.0
  %v2221 = vmax.f32 %v2207, 0.0
  %v2222 = vmax.f32 %v2209, 0.0
  %v2223 = vmax.f32 %v2213, 0.0
  %v2224 = vmax.f32 %v2215, 0.0
  %s2225 = scalar_lea.vmem %s3, 512
  %v2226 = vld [vmem:[%s2225] sm:$0xff]
  %v2227 = vld [vmem:[%s2225 + $0x8] sm:$0xff]
  %v2228 = vld [vmem:[%s2225 + $0x10] sm:$0xff]
  %v2229 = vld [vmem:[%s2225 + $0x18] sm:$0xff]
  %v2230 = vld [vmem:[%s2225 + $0x20] sm:$0xff]
  %v2231 = vld [vmem:[%s2225 + $0x28] sm:$0xff]
  %v2232 = vld [vmem:[%s2225 + $0x30] sm:$0xff]
  %v2233 = vld [vmem:[%s2225 + $0x38] sm:$0xff]
  %2234 = vrot.lane.b32.xlu0 %v2217, 2
  %v2235 = vpop.permute.xlu0 %2234
  %2236 = vrot.lane.b32.xlu0 %v2219, 2
  %v2237 = vpop.permute.xlu0 %2236
  %2238 = vrot.lane.b32.xlu0 %v2221, 2
  %v2239 = vpop.permute.xlu0 %2238
  %2240 = vrot.lane.b32.xlu0 %v2223, 2
  %v2241 = vpop.permute.xlu0 %2240
  %2242 = vrot.lane.b32.xlu0 %v2218, 2
  %v2243 = vpop.permute.xlu0 %2242
  %2244 = vrot.lane.b32.xlu0 %v2220, 2
  %v2245 = vpop.permute.xlu0 %2244
  %2246 = vrot.lane.b32.xlu0 %v2222, 2
  %v2247 = vpop.permute.xlu0 %2246
  %2248 = vrot.lane.b32.xlu0 %v2224, 2
  %v2249 = vpop.permute.xlu0 %2248
  %v2250 = vsel %vm41, %v2235, %v2243
  %v2251 = vsel %vm41, %v2237, %v2245
  %v2252 = vsel %vm41, %v2239, %v2247
  %v2253 = vsel %vm41, %v2241, %v2249
  %v2254 = vsel %vm41, %v2243, %v2235
  %v2255 = vsel %vm41, %v2245, %v2237
  %v2256 = vsel %vm41, %v2247, %v2239
  %v2257 = vsel %vm41, %v2249, %v2241
  %v2258 = vmul.f32 %v2254, %v48
  %v2259 = vmul.f32 %v2250, %v52
  %v2260 = vmul.f32 %v2255, %v48
  %v2261 = vmul.f32 %v2251, %v52
  %v2262 = vmul.f32 %v2256, %v48
  %v2263 = vmul.f32 %v2252, %v52
  %v2264 = vmul.f32 %v2257, %v48
  %v2265 = vmul.f32 %v2253, %v52
  %2266 = vrot.lane.b32.xlu0 %v2217, 1
  %v2267 = vpop.permute.xlu0 %2266
  %2268 = vrot.lane.b32.xlu0 %v2219, 1
  %v2269 = vpop.permute.xlu0 %2268
  %2270 = vrot.lane.b32.xlu0 %v2221, 1
  %v2271 = vpop.permute.xlu0 %2270
  %2272 = vrot.lane.b32.xlu0 %v2223, 1
  %v2273 = vpop.permute.xlu0 %2272
  %2274 = vrot.lane.b32.xlu0 %v2218, 1
  %v2275 = vpop.permute.xlu0 %2274
  %2276 = vrot.lane.b32.xlu0 %v2220, 1
  %v2277 = vpop.permute.xlu0 %2276
  %2278 = vrot.lane.b32.xlu0 %v2222, 1
  %v2279 = vpop.permute.xlu0 %2278
  %2280 = vrot.lane.b32.xlu0 %v2224, 1
  %v2281 = vpop.permute.xlu0 %2280
  %v2282 = vsel %vm61, %v2267, %v2275
  %v2283 = vsel %vm61, %v2269, %v2277
  %v2284 = vsel %vm61, %v2271, %v2279
  %v2285 = vsel %vm61, %v2273, %v2281
  %v2286 = vsel %vm61, %v2275, %v2267
  %v2287 = vsel %vm61, %v2277, %v2269
  %v2288 = vsel %vm61, %v2279, %v2271
  %v2289 = vsel %vm61, %v2281, %v2273
  %v2290 = vmul.f32 %v2286, %v68
  %v2291 = vmul.f32 %v2282, %v72
  %v2292 = vmul.f32 %v2287, %v68
  %v2293 = vmul.f32 %v2283, %v72
  %v2294 = vmul.f32 %v2288, %v68
  %v2295 = vmul.f32 %v2284, %v72
  %v2296 = vmul.f32 %v2289, %v68
  %v2297 = vmul.f32 %v2285, %v72
  %2298 = vrot.lane.b32.xlu0 %v2217, 127
  %v2299 = vpop.permute.xlu0 %2298
  %2300 = vrot.lane.b32.xlu0 %v2219, 127
  %v2301 = vpop.permute.xlu0 %2300
  %2302 = vrot.lane.b32.xlu0 %v2221, 127
  %v2303 = vpop.permute.xlu0 %2302
  %2304 = vrot.lane.b32.xlu0 %v2223, 127
  %v2305 = vpop.permute.xlu0 %2304
  %2306 = vrot.lane.b32.xlu0 %v2218, 127
  %v2307 = vpop.permute.xlu0 %2306
  %2308 = vrot.lane.b32.xlu0 %v2220, 127
  %v2309 = vpop.permute.xlu0 %2308
  %2310 = vrot.lane.b32.xlu0 %v2222, 127
  %v2311 = vpop.permute.xlu0 %2310
  %2312 = vrot.lane.b32.xlu0 %v2224, 127
  %v2313 = vpop.permute.xlu0 %2312
  %v2314 = vsel %vm81, %v2299, %v2307
  %v2315 = vsel %vm81, %v2301, %v2309
  %v2316 = vsel %vm81, %v2303, %v2311
  %v2317 = vsel %vm81, %v2305, %v2313
  %v2318 = vsel %vm81, %v2307, %v2299
  %v2319 = vsel %vm81, %v2309, %v2301
  %v2320 = vsel %vm81, %v2311, %v2303
  %v2321 = vsel %vm81, %v2313, %v2305
  %v2322 = vmul.f32 %v2314, %v88
  %v2323 = vmul.f32 %v2318, %v92
  %v2324 = vmul.f32 %v2315, %v88
  %v2325 = vmul.f32 %v2319, %v92
  %v2326 = vmul.f32 %v2316, %v88
  %v2327 = vmul.f32 %v2320, %v92
  %v2328 = vmul.f32 %v2317, %v88
  %v2329 = vmul.f32 %v2321, %v92
  %2330 = vrot.lane.b32.xlu0 %v2217, 126
  %v2331 = vpop.permute.xlu0 %2330
  %2332 = vrot.lane.b32.xlu0 %v2219, 126
  %v2333 = vpop.permute.xlu0 %2332
  %2334 = vrot.lane.b32.xlu0 %v2221, 126
  %v2335 = vpop.permute.xlu0 %2334
  %2336 = vrot.lane.b32.xlu0 %v2223, 126
  %v2337 = vpop.permute.xlu0 %2336
  %2338 = vrot.lane.b32.xlu0 %v2218, 126
  %v2339 = vpop.permute.xlu0 %2338
  %2340 = vrot.lane.b32.xlu0 %v2220, 126
  %v2341 = vpop.permute.xlu0 %2340
  %2342 = vrot.lane.b32.xlu0 %v2222, 126
  %v2343 = vpop.permute.xlu0 %2342
  %2344 = vrot.lane.b32.xlu0 %v2224, 126
  %v2345 = vpop.permute.xlu0 %2344
  %v2346 = vsel %vm101, %v2331, %v2339
  %v2347 = vsel %vm101, %v2333, %v2341
  %v2348 = vsel %vm101, %v2335, %v2343
  %v2349 = vsel %vm101, %v2337, %v2345
  %v2350 = vsel %vm101, %v2339, %v2331
  %v2351 = vsel %vm101, %v2341, %v2333
  %v2352 = vsel %vm101, %v2343, %v2335
  %v2353 = vsel %vm101, %v2345, %v2337
  %v2354 = vmul.f32 %v2346, %v108
  %v2355 = vmul.f32 %v2350, %v112
  %v2356 = vmul.f32 %v2347, %v108
  %v2357 = vmul.f32 %v2351, %v112
  %v2358 = vmul.f32 %v2348, %v108
  %v2359 = vmul.f32 %v2352, %v112
  %v2360 = vmul.f32 %v2349, %v108
  %v2361 = vmul.f32 %v2353, %v112
  %v2363 = vsel %vm389, %v2227, 0
  %v2366 = vsel %vm389, %v2229, 0
  %v2369 = vsel %vm389, %v2231, 0
  %v2372 = vsel %vm389, %v2233, 0
  %2374 = vmatprep.subr.mxu0 %v2259
  %2375 = vmatpush1.msra.mxu0 %v2258
  %2376 = vmatprep.subr.mxu0 %v2261
  %2377 = vmatpush1.msra.mxu0 %v2260
  %2378 = vmatprep.subr.mxu0 %v2263
  %2379 = vmatpush1.msra.mxu0 %v2262
  %2380 = vmatprep.subr.mxu0 %v2265
  %2381 = vmatpush1.msra.mxu0 %v2264
  %2382 = vmatprep.subr.mxu0 %v2291
  %2383 = vmatpush1.msra.mxu0 %v2290
  %2384 = vmatprep.subr.mxu0 %v2293
  %2385 = vmatpush1.msra.mxu0 %v2292
  %2386 = vmatprep.subr.mxu0 %v2295
  %2387 = vmatpush1.msra.mxu0 %v2294
  %2388 = vmatprep.subr.mxu0 %v2297
  %2389 = vmatpush1.msra.mxu0 %v2296
  %2390 = vmatprep.subr.mxu0 %v2218
  %2391 = vmatpush1.msra.mxu0 %v2217
  %2392 = vmatprep.subr.mxu0 %v2220
  %2393 = vmatpush1.msra.mxu0 %v2219
  %2394 = vmatprep.subr.mxu0 %v2222
  %2395 = vmatpush1.msra.mxu0 %v2221
  %2396 = vmatprep.subr.mxu0 %v2224
  %2397 = vmatpush1.msra.mxu0 %v2223
  %2398 = vmatprep.subr.mxu0 %v2323
  %2399 = vmatpush1.msra.mxu0 %v2322
  %2400 = vmatprep.subr.mxu0 %v2325
  %2401 = vmatpush1.msra.mxu0 %v2324
  %2402 = vmatprep.subr.mxu0 %v2327
  %2403 = vmatpush1.msra.mxu0 %v2326
  %2404 = vmatprep.subr.mxu0 %v2329
  %2405 = vmatpush1.msra.mxu0 %v2328
  %2406 = vmatprep.subr.mxu0 %v2355
  %2407 = vmatpush1.msra.mxu0 %v2354
  %2408 = vmatprep.subr.mxu0 %v2357
  %2409 = vmatpush1.msra.mxu0 %v2356
  %2410 = vmatprep.subr.mxu0 %v2359
  %2411 = vmatpush1.msra.mxu0 %v2358
  %2412 = vmatprep.subr.mxu0 %v2361
  %2413 = vmatpush1.msra.mxu0 %v2360
  %2414 = vmatprep.subr.mxu0 %v404
  %2415 = vmatpush1.msra.mxu0 %v404
  %2416 = vmatprep.subr.mxu0 0.0
  %2417 = vmatpush1.msra.mxu0 0.0
  %2418 = vmatprep.subr.mxu0 0.0
  %2419 = vmatpush1.msra.mxu0 0.0
  %2420 = vmatprep.subr.mxu0 0.0
  %2421 = vmatpush1.msra.mxu0 0.0
  %2422 = vmatprep.subr.mxu0 0.0
  %2423 = vmatpush1.msra.mxu0 0.0
  %2424 = vmatprep.subr.mxu0 0.0
  %2425 = vmatpush1.msra.mxu0 0.0
  %2426 = vmatprep.subr.mxu0 0.0
  %2427 = vmatpush1.msra.mxu0 0.0
  %2428 = vmatprep.subr.mxu0 0.0
  %2429 = vmatpush1.msra.mxu0 0.0
  %2430 = vmatprep.subr.mxu0 0.0
  %2431 = vmatpush1.msra.mxu0 0.0
  %2432 = vmatprep.subr.mxu0 0.0
  %2433 = vmatpush1.msra.mxu0 0.0
  %2434 = vmatprep.subr.mxu0 0.0
  %2435 = vmatpush1.msra.mxu0 0.0
  %2436 = vmatprep.subr.mxu0 0.0
  %2437 = vmatpush1.msra.mxu0 0.0
  %2438 = vmatprep.mubr.f32.mxu0 %v2363
  %2439 = vmatmul.mubr.f32.gmra.mrb[0].mxu0 %v2226
  %v2440 = vpop.f32.mrb[0].mxu0
  %v2441 = vadd.f32 0.0, %v2440
  %v2442 = vpop.f32.mrb[0].mxu0
  %v2443 = vadd.f32 0.0, %v2442
  %2444 = vmatprep.mubr.f32.mxu0 %v2366
  %2445 = vmatmul.mubr.f32.gmra.mrb[0].mxu0 %v2228
  %v2446 = vpop.f32.mrb[0].mxu0
  %v2447 = vadd.f32 0.0, %v2446
  %v2448 = vpop.f32.mrb[0].mxu0
  %v2449 = vadd.f32 0.0, %v2448
  %2450 = vmatprep.mubr.f32.mxu0 %v2369
  %2451 = vmatmul.mubr.f32.gmra.mrb[0].mxu0 %v2230
  %v2452 = vpop.f32.mrb[0].mxu0
  %v2453 = vadd.f32 0.0, %v2452
  %v2454 = vpop.f32.mrb[0].mxu0
  %v2455 = vadd.f32 0.0, %v2454
  %2456 = vmatprep.mubr.f32.mxu0 %v2372
  %2457 = vmatmul.mubr.f32.gmra.mrb[0].mxu0 %v2232
  %v2458 = vpop.f32.mrb[0].mxu0
  %v2459 = vadd.f32 0.0, %v2458
  %v2460 = vpop.f32.mrb[0].mxu0
  %v2461 = vadd.f32 0.0, %v2460
  %2462 = vdwg.mxu0
  %v2463 = vmax.f32 %v2441, 0.0
  %v2464 = vmax.f32 %v2443, 0.0
  %v2465 = vmax.f32 %v2447, 0.0
  %v2466 = vmax.f32 %v2449, 0.0
  %v2467 = vmax.f32 %v2453, 0.0
  %v2468 = vmax.f32 %v2455, 0.0
  %v2469 = vmax.f32 %v2459, 0.0
  %v2470 = vmax.f32 %v2461, 0.0
  %v2471 = vld [vmem:[%s4] sm:$0xff]
  %2472 = vrot.lane.b32.xlu0 %v2463, 2
  %v2473 = vpop.permute.xlu0 %2472
  %2474 = vrot.lane.b32.xlu0 %v2465, 2
  %v2475 = vpop.permute.xlu0 %2474
  %2476 = vrot.lane.b32.xlu0 %v2467, 2
  %v2477 = vpop.permute.xlu0 %2476
  %2478 = vrot.lane.b32.xlu0 %v2469, 2
  %v2479 = vpop.permute.xlu0 %2478
  %2480 = vrot.lane.b32.xlu0 %v2464, 2
  %v2481 = vpop.permute.xlu0 %2480
  %2482 = vrot.lane.b32.xlu0 %v2466, 2
  %v2483 = vpop.permute.xlu0 %2482
  %2484 = vrot.lane.b32.xlu0 %v2468, 2
  %v2485 = vpop.permute.xlu0 %2484
  %2486 = vrot.lane.b32.xlu0 %v2470, 2
  %v2487 = vpop.permute.xlu0 %2486
  %v2488 = vsel %vm41, %v2473, %v2481
  %v2489 = vsel %vm41, %v2475, %v2483
  %v2490 = vsel %vm41, %v2477, %v2485
  %v2491 = vsel %vm41, %v2479, %v2487
  %v2492 = vsel %vm41, %v2481, %v2473
  %v2493 = vsel %vm41, %v2483, %v2475
  %v2494 = vsel %vm41, %v2485, %v2477
  %v2495 = vsel %vm41, %v2487, %v2479
  %v2496 = vmul.f32 %v2492, %v48
  %v2497 = vmul.f32 %v2488, %v52
  %v2498 = vmul.f32 %v2493, %v48
  %v2499 = vmul.f32 %v2489, %v52
  %v2500 = vmul.f32 %v2494, %v48
  %v2501 = vmul.f32 %v2490, %v52
  %v2502 = vmul.f32 %v2495, %v48
  %v2503 = vmul.f32 %v2491, %v52
  %2504 = vrot.lane.b32.xlu0 %v2463, 1
  %v2505 = vpop.permute.xlu0 %2504
  %2506 = vrot.lane.b32.xlu0 %v2465, 1
  %v2507 = vpop.permute.xlu0 %2506
  %2508 = vrot.lane.b32.xlu0 %v2467, 1
  %v2509 = vpop.permute.xlu0 %2508
  %2510 = vrot.lane.b32.xlu0 %v2469, 1
  %v2511 = vpop.permute.xlu0 %2510
  %2512 = vrot.lane.b32.xlu0 %v2464, 1
  %v2513 = vpop.permute.xlu0 %2512
  %2514 = vrot.lane.b32.xlu0 %v2466, 1
  %v2515 = vpop.permute.xlu0 %2514
  %2516 = vrot.lane.b32.xlu0 %v2468, 1
  %v2517 = vpop.permute.xlu0 %2516
  %2518 = vrot.lane.b32.xlu0 %v2470, 1
  %v2519 = vpop.permute.xlu0 %2518
  %v2520 = vsel %vm61, %v2505, %v2513
  %v2521 = vsel %vm61, %v2507, %v2515
  %v2522 = vsel %vm61, %v2509, %v2517
  %v2523 = vsel %vm61, %v2511, %v2519
  %v2524 = vsel %vm61, %v2513, %v2505
  %v2525 = vsel %vm61, %v2515, %v2507
  %v2526 = vsel %vm61, %v2517, %v2509
  %v2527 = vsel %vm61, %v2519, %v2511
  %v2528 = vmul.f32 %v2524, %v68
  %v2529 = vmul.f32 %v2520, %v72
  %v2530 = vmul.f32 %v2525, %v68
  %v2531 = vmul.f32 %v2521, %v72
  %v2532 = vmul.f32 %v2526, %v68
  %v2533 = vmul.f32 %v2522, %v72
  %v2534 = vmul.f32 %v2527, %v68
  %v2535 = vmul.f32 %v2523, %v72
  %2536 = vrot.lane.b32.xlu0 %v2463, 127
  %v2537 = vpop.permute.xlu0 %2536
  %2538 = vrot.lane.b32.xlu0 %v2465, 127
  %v2539 = vpop.permute.xlu0 %2538
  %2540 = vrot.lane.b32.xlu0 %v2467, 127
  %v2541 = vpop.permute.xlu0 %2540
  %2542 = vrot.lane.b32.xlu0 %v2469, 127
  %v2543 = vpop.permute.xlu0 %2542
  %2544 = vrot.lane.b32.xlu0 %v2464, 127
  %v2545 = vpop.permute.xlu0 %2544
  %2546 = vrot.lane.b32.xlu0 %v2466, 127
  %v2547 = vpop.permute.xlu0 %2546
  %2548 = vrot.lane.b32.xlu0 %v2468, 127
  %v2549 = vpop.permute.xlu0 %2548
  %2550 = vrot.lane.b32.xlu0 %v2470, 127
  %v2551 = vpop.permute.xlu0 %2550
  %v2552 = vsel %vm81, %v2537, %v2545
  %v2553 = vsel %vm81, %v2539, %v2547
  %v2554 = vsel %vm81, %v2541, %v2549
  %v2555 = vsel %vm81, %v2543, %v2551
  %v2556 = vsel %vm81, %v2545, %v2537
  %v2557 = vsel %vm81, %v2547, %v2539
  %v2558 = vsel %vm81, %v2549, %v2541
  %v2559 = vsel %vm81, %v2551, %v2543
  %v2560 = vmul.f32 %v2552, %v88
  %v2561 = vmul.f32 %v2556, %v92
  %v2562 = vmul.f32 %v2553, %v88
  %v2563 = vmul.f32 %v2557, %v92
  %v2564 = vmul.f32 %v2554, %v88
  %v2565 = vmul.f32 %v2558, %v92
  %v2566 = vmul.f32 %v2555, %v88
  %v2567 = vmul.f32 %v2559, %v92
  %2568 = vrot.lane.b32.xlu0 %v2463, 126
  %v2569 = vpop.permute.xlu0 %2568
  %2570 = vrot.lane.b32.xlu0 %v2465, 126
  %v2571 = vpop.permute.xlu0 %2570
  %2572 = vrot.lane.b32.xlu0 %v2467, 126
  %v2573 = vpop.permute.xlu0 %2572
  %2574 = vrot.lane.b32.xlu0 %v2469, 126
  %v2575 = vpop.permute.xlu0 %2574
  %2576 = vrot.lane.b32.xlu0 %v2464, 126
  %v2577 = vpop.permute.xlu0 %2576
  %2578 = vrot.lane.b32.xlu0 %v2466, 126
  %v2579 = vpop.permute.xlu0 %2578
  %2580 = vrot.lane.b32.xlu0 %v2468, 126
  %v2581 = vpop.permute.xlu0 %2580
  %2582 = vrot.lane.b32.xlu0 %v2470, 126
  %v2583 = vpop.permute.xlu0 %2582
  %v2584 = vsel %vm101, %v2569, %v2577
  %v2585 = vsel %vm101, %v2571, %v2579
  %v2586 = vsel %vm101, %v2573, %v2581
  %v2587 = vsel %vm101, %v2575, %v2583
  %v2588 = vsel %vm101, %v2577, %v2569
  %v2589 = vsel %vm101, %v2579, %v2571
  %v2590 = vsel %vm101, %v2581, %v2573
  %v2591 = vsel %vm101, %v2583, %v2575
  %v2592 = vmul.f32 %v2584, %v108
  %v2593 = vmul.f32 %v2588, %v112
  %v2594 = vmul.f32 %v2585, %v108
  %v2595 = vmul.f32 %v2589, %v112
  %v2596 = vmul.f32 %v2586, %v108
  %v2597 = vmul.f32 %v2590, %v112
  %v2598 = vmul.f32 %v2587, %v108
  %v2599 = vmul.f32 %v2591, %v112
  %v2601 = vcombine.high %v2471, %v2471
  %v2602 = vsel %vm389, %v2601, 0
  %2604 = vmatprep.subr.mxu0 %v2497
  %2605 = vmatpush1.msra.mxu0 %v2496
  %2606 = vmatprep.subr.mxu0 %v2499
  %2607 = vmatpush1.msra.mxu0 %v2498
  %2608 = vmatprep.subr.mxu0 %v2501
  %2609 = vmatpush1.msra.mxu0 %v2500
  %2610 = vmatprep.subr.mxu0 %v2503
  %2611 = vmatpush1.msra.mxu0 %v2502
  %2612 = vmatprep.subr.mxu0 %v2529
  %2613 = vmatpush1.msra.mxu0 %v2528
  %2614 = vmatprep.subr.mxu0 %v2531
  %2615 = vmatpush1.msra.mxu0 %v2530
  %2616 = vmatprep.subr.mxu0 %v2533
  %2617 = vmatpush1.msra.mxu0 %v2532
  %2618 = vmatprep.subr.mxu0 %v2535
  %2619 = vmatpush1.msra.mxu0 %v2534
  %2620 = vmatprep.subr.mxu0 %v2464
  %2621 = vmatpush1.msra.mxu0 %v2463
  %2622 = vmatprep.subr.mxu0 %v2466
  %2623 = vmatpush1.msra.mxu0 %v2465
  %2624 = vmatprep.subr.mxu0 %v2468
  %2625 = vmatpush1.msra.mxu0 %v2467
  %2626 = vmatprep.subr.mxu0 %v2470
  %2627 = vmatpush1.msra.mxu0 %v2469
  %2628 = vmatprep.subr.mxu0 %v2561
  %2629 = vmatpush1.msra.mxu0 %v2560
  %2630 = vmatprep.subr.mxu0 %v2563
  %2631 = vmatpush1.msra.mxu0 %v2562
  %2632 = vmatprep.subr.mxu0 %v2565
  %2633 = vmatpush1.msra.mxu0 %v2564
  %2634 = vmatprep.subr.mxu0 %v2567
  %2635 = vmatpush1.msra.mxu0 %v2566
  %2636 = vmatprep.subr.mxu0 %v2593
  %2637 = vmatpush1.msra.mxu0 %v2592
  %2638 = vmatprep.subr.mxu0 %v2595
  %2639 = vmatpush1.msra.mxu0 %v2594
  %2640 = vmatprep.subr.mxu0 %v2597
  %2641 = vmatpush1.msra.mxu0 %v2596
  %2642 = vmatprep.subr.mxu0 %v2599
  %2643 = vmatpush1.msra.mxu0 %v2598
  %2644 = vmatprep.subr.mxu0 %v404
  %2645 = vmatpush1.msra.mxu0 %v404
  %2646 = vmatprep.subr.mxu0 0.0
  %2647 = vmatpush1.msra.mxu0 0.0
  %2648 = vmatprep.subr.mxu0 0.0
  %2649 = vmatpush1.msra.mxu0 0.0
  %2650 = vmatprep.subr.mxu0 0.0
  %2651 = vmatpush1.msra.mxu0 0.0
  %2652 = vmatprep.subr.mxu0 0.0
  %2653 = vmatpush1.msra.mxu0 0.0
  %2654 = vmatprep.subr.mxu0 0.0
  %2655 = vmatpush1.msra.mxu0 0.0
  %2656 = vmatprep.subr.mxu0 0.0
  %2657 = vmatpush1.msra.mxu0 0.0
  %2658 = vmatprep.subr.mxu0 0.0
  %2659 = vmatpush1.msra.mxu0 0.0
  %2660 = vmatprep.subr.mxu0 0.0
  %2661 = vmatpush1.msra.mxu0 0.0
  %2662 = vmatprep.subr.mxu0 0.0
  %2663 = vmatpush1.msra.mxu0 0.0
  %2664 = vmatprep.subr.mxu0 0.0
  %2665 = vmatpush1.msra.mxu0 0.0
  %2666 = vmatprep.subr.mxu0 0.0
  %2667 = vmatpush1.msra.mxu0 0.0
  %2668 = vmatprep.mubr.f32.mxu0 %v2602
  %2669 = vmatmul.mubr.f32.gmra.mrb[0].mxu0 %v2471
  %v2670 = vpop.f32.mrb[0].mxu0
  %v2671 = vadd.f32 0.0, %v2670
  %v2672 = vpop.f32.mrb[0].mxu0
  %v2673 = vadd.f32 0.0, %v2672
  %2674 = vdwg.mxu0
  %v2677 = vcombine.low %v2671, %v2673
  %2679 = vst [vmem:[%s5] sm:$0xff] %v2677
  // Predicated region
  $region22: #{network11_pallas.1} parent=0 // pred_check
    _
  $region23: #{network11_pallas.1} parent=0 // pred_check_branch
    %2681 = sbr.rel (0) target = $region25
  $region24: #{network11_pallas.1} parent=0 // pred_region
    _
  $region25: #{network11_pallas.1} parent=0 // pred_fallthru
    _
  // Predicated region
  $region26: #{network11_pallas.1} parent=0 // pred_check
    _
  $region27: #{network11_pallas.1} parent=0 // pred_check_branch
    %2683 = sbr.rel (0) target = $region29
  $region28: #{network11_pallas.1} parent=0 // pred_region
    _
  $region29: #{network11_pallas.1} parent=0 // pred_fallthru
    _

</llo_original>
